<compile_context>
chip_gen: v6e
topology: v6e:2x2x1
jax: 0.10.0
libtpu: 0.0.40
codegen_flags: <defaults>
</compile_context>

<pallas_src>
import functools

import jax
import jax.numpy as jnp
from jax.experimental import pallas as pl
from jax.experimental.pallas import tpu as pltpu

# ----------------------------- problem sizes ---------------------------------
B = 2
C = 4
H = W_IMG = 16
HW = H * W_IMG
N_VERTS = 512          # stand-in for SMPL's 6890 vertices
N_VERTS431 = 64        # stand-in for the 431-vertex downsampled mesh
N_J14 = 14             # H36M 14 joints
OUT3N = 3 * N_VERTS
K_REG = N_J14 + N_VERTS431 + 1   # 79 stacked regressor rows: [joints14 | verts431 | pelvis]
K_PAD = 128                      # padded to one full lane tile

# loss_weights dict of the module (only >0 entries kept, as in __init__)
LOSS_WEIGHTS = {'verts431': 1.0, 'joints14': 1.0, 'pelvis': 0.5, 'joints14_2d': 0.01}


# ------------------------- fused forward kernel -------------------------------
def _fused_kernel(w_v431, w_j14, w_pel, w_2d, half_w,
                  img_ref, w_ref, init_ref, rT_ref, gtw_ref, T_ref, bif_ref,
                  loss_ref, predv_ref, gtv_ref, reg_ref, vall_ref):
    # img_ref:  (B, C, H*W)          w_ref:   (C, 3N)  coordinate-major columns [x..|y..|z..]
    # init_ref: (1, 3N)              rT_ref:  (N, K_PAD) stacked regressor (transposed, zero-padded)
    # gtw_ref:  (B, 3, N)            T_ref:   (B, 4, 4)      bif_ref: (B, 1)
    # outputs:  loss (B,1), pred verts (B,3,N), gt verts (B,3,N), stacked regression (2*3*B, K_PAD)
    # scratch:  vall_ref (2*3*B, N) -- stacked matmul LHS
    Bq = gtw_ref.shape[0]
    n = gtw_ref.shape[2]

    # ---- "net": global-average-pool + linear head (coordinate-major offsets) ----
    pooled = jnp.mean(img_ref[...], axis=-1)                                   # (B, C)
    pred_flat = (jnp.dot(pooled, w_ref[...], preferred_element_type=jnp.float32)
                 + init_ref[...])                                              # (B, 3N)

    Tm = T_ref[...]                                                            # (B, 4, 4)
    gtw = gtw_ref[...]                                                         # (B, 3, N)

    # assemble the stacked matmul LHS; row layout is c-major:
    #   rows [c*B:(c+1)*B]     -> pred coordinate c of all samples
    #   rows [(3+c)*B:(4+c)*B] -> gt   coordinate c of all samples
    for c in range(3):
        p_c = pred_flat[:, c * n:(c + 1) * n]                                  # (B, N)
        predv_ref[:, c, :] = p_c
        vall_ref[c * Bq:(c + 1) * Bq, :] = p_c

        # apply_T_on_points (world -> cam) on the VPU: cam_c = R[c,:] . p + t[c]
        g_c = (Tm[:, c, 0:1] * gtw[:, 0, :]
               + Tm[:, c, 1:2] * gtw[:, 1, :]
               + Tm[:, c, 2:3] * gtw[:, 2, :]
               + Tm[:, c, 3:4])                                                # (B, N)
        gtv_ref[:, c, :] = g_c
        vall_ref[(3 + c) * Bq:(4 + c) * Bq, :] = g_c

    # ---- stacked regression: ONE MXU op for pred+gt x {joints14, verts431, pelvis} ----
    reg = jnp.dot(vall_ref[...], rT_ref[...], preferred_element_type=jnp.float32)  # (2*3*B, K_PAD)
    reg_ref[...] = reg

    # ---- weighted per-sample loss (all lane-dense) -------------------------------
    rp = [reg[c * Bq:(c + 1) * Bq, :] for c in range(3)]          # pred x/y/z, each (B, K_PAD)
    rg = [reg[(3 + c) * Bq:(4 + c) * Bq, :] for c in range(3)]    # gt   x/y/z

    dsum = (jnp.abs(rp[0] - rg[0])
            + jnp.abs(rp[1] - rg[1])
            + jnp.abs(rp[2] - rg[2]))                                          # (B, K_PAD)
    l_j14 = jnp.sum(dsum[:, 0:N_J14], axis=1, keepdims=True) / (3.0 * N_J14)
    l_v431 = jnp.sum(dsum[:, N_J14:N_J14 + N_VERTS431], axis=1,
                     keepdims=True) / (3.0 * N_VERTS431)
    l_pel = dsum[:, N_J14 + N_VERTS431:N_J14 + N_VERTS431 + 1] / 3.0

    # gt_bi_joints14_2d-style pinhole projection into the bbx image (bi_f focal).
    # TODO(synk): no epsilon guard on z (matches reference); synthetic data keeps z ~ 5.
    bif = bif_ref[...]                                                         # (B, 1)
    inv_zp = pl.reciprocal(rp[2][:, 0:N_J14], approx=True)                     # EUP slot
    inv_zg = pl.reciprocal(rg[2][:, 0:N_J14], approx=True)
    px = rp[0][:, 0:N_J14] * inv_zp * bif + half_w
    py = rp[1][:, 0:N_J14] * inv_zp * bif + half_w
    gx = rg[0][:, 0:N_J14] * inv_zg * bif + half_w
    gy = rg[1][:, 0:N_J14] * inv_zg * bif + half_w
    l_2d = (jnp.sum(jnp.abs(px - gx), axis=1, keepdims=True)
            + jnp.sum(jnp.abs(py - gy), axis=1, keepdims=True)) / (2.0 * N_J14)

    loss_ref[...] = (w_v431 * l_v431 + w_j14 * l_j14
                     + w_pel * l_pel + w_2d * l_2d)                            # (B, 1)


def fused_forward(image, w_net_cm, init_verts_cm, R_allT, gt_w_cm, T_w2c, bi_f):
    """Single pallas_call: net -> apply_T -> stacked regression -> loss."""
    Bq, Cq, Hq, Wq = image.shape
    n = gt_w_cm.shape[2]
    k_pad = R_allT.shape[1]
    img = image.reshape(Bq, Cq, Hq * Wq)

    kernel = functools.partial(
        _fused_kernel,
        LOSS_WEIGHTS['verts431'], LOSS_WEIGHTS['joints14'],
        LOSS_WEIGHTS['pelvis'], LOSS_WEIGHTS['joints14_2d'],
        0.5 * Wq,
    )
    vmem = pl.BlockSpec(memory_space=pltpu.MemorySpace.VMEM)
    loss, pred_cm, gt_cm, reg = pl.pallas_call(
        kernel,
        out_shape=(
            jax.ShapeDtypeStruct((Bq, 1), jnp.float32),             # per-sample loss
            jax.ShapeDtypeStruct((Bq, 3, n), jnp.float32),          # pred_c_verts (coord-major)
            jax.ShapeDtypeStruct((Bq, 3, n), jnp.float32),          # gt_c_verts   (coord-major)
            jax.ShapeDtypeStruct((2 * 3 * Bq, k_pad), jnp.float32), # stacked regression output
        ),
        in_specs=[vmem] * 7,
        out_specs=(vmem, vmem, vmem, vmem),
        scratch_shapes=[pltpu.VMEM((2 * 3 * Bq, n), jnp.float32)],
    )(img, w_net_cm, init_verts_cm, R_allT, gt_w_cm, T_w2c,
      bi_f.reshape(Bq, 1).astype(jnp.float32))
    return loss, pred_cm, gt_cm, reg


# ------------------------- NetworkWrapper.forward -----------------------------
def network_wrapper_forward(batch, params, compute_supervision=True, compute_loss=True):
    # ---- preprocess ----
    image = batch['image']
    Bq, Cq, Hq, Wq = image.shape
    assert Wq == Hq, 'we assume a squared input image'
    assert Wq % 4 == 0
    batch['B'] = Bq
    batch['init_joints14'] = jnp.broadcast_to(params['init_joints14'], (Bq, N_J14, 3))
    batch['init_verts431'] = jnp.broadcast_to(params['init_verts431'], (Bq, N_VERTS431, 3))
    batch['ri_f'] = batch['K'][:, 0, 0]
    batch['bi_f'] = batch['ri_f'] * Wq / (batch['bbx_lurb'][:, 2] - batch['bbx_lurb'][:, 0])
    batch['bi_w'] = Wq
    # TODO(synk): get_pc_in_frustum / scene voxel lookup needs external scan data; omitted.
    # TODO(synk): gkernel_3x3 heatmap smoothing, pcSeg / bi4s_seg supervision, and
    #             train_extra_flip augmentation are dataset/file dependent; omitted.

    # coordinate-major (B, 3, N) layout for the fused kernel (vertex index on lane axis)
    gt_w_cm = jnp.swapaxes(batch['gt_w_verts'], 1, 2)

    # ---- fused net + compute_supervision + compute_loss (one pallas_call) ----
    # TODO(synk): compute_supervision/compute_loss=False short-circuits would need a
    #             net-only kernel; the fused kernel always evaluates the full chain.
    loss, pred_cm, gt_cm, reg = fused_forward(
        image, params['w_net_cm'], params['init_verts_cm'], params['R_allT'],
        gt_w_cm, batch['T_w2c'], batch['bi_f'])

    # All point sets below are stored coordinate-major (B, 3, N) / (B, 3, K) — lane-dense.
    reg_p = jnp.swapaxes(reg[:3 * Bq].reshape(3, Bq, K_PAD), 0, 1)   # (B, 3, K_PAD)
    reg_g = jnp.swapaxes(reg[3 * Bq:].reshape(3, Bq, K_PAD), 0, 1)
    batch.update({
        'pred_c_verts': pred_cm,
        'pred_c_joints14': reg_p[:, :, :N_J14],
        'pred_c_verts431': reg_p[:, :, N_J14:N_J14 + N_VERTS431],
        'pred_c_pelvis': reg_p[:, :, N_J14 + N_VERTS431:K_REG],
    })
    if compute_supervision:
        batch.update({
            'gt_c_verts': gt_cm,
            'gt_c_joints14': reg_g[:, :, :N_J14],
            'gt_c_verts431': reg_g[:, :, N_J14:N_J14 + N_VERTS431],
            'gt_c_pelvis': reg_g[:, :, N_J14 + N_VERTS431:K_REG],
        })
    if compute_loss:
        loss_vec = loss[:, 0]
        assert loss_vec.shape[0] == Bq
        batch['loss'] = loss_vec
        batch['loss_stats'] = {'loss_weighted_sum': loss_vec}
    return batch


# ----------------------------------- main --------------------------------------
if __name__ == "__main__":
    key = jax.random.PRNGKey(0)
    ks = jax.random.split(key, 8)

    # deterministic synthetic parameters / buffers (stand-ins for SMPL + mesh_sampler)
    init_verts = (jax.random.normal(ks[0], (N_VERTS, 3), jnp.float32) * 0.2
                  + jnp.array([0.0, 0.0, 5.0], jnp.float32))
    J14 = jax.random.uniform(ks[1], (N_J14, N_VERTS), jnp.float32)
    J14 = J14 / J14.sum(axis=1, keepdims=True)
    D431 = jax.random.uniform(ks[2], (N_VERTS431, N_VERTS), jnp.float32)
    D431 = D431 / D431.sum(axis=1, keepdims=True)
    Jpelvis = jax.random.uniform(ks[3], (1, N_VERTS), jnp.float32)
    Jpelvis = Jpelvis / Jpelvis.sum(axis=1, keepdims=True)

    # stacked, lane-padded regressor: rows = [J14 | D431 | pelvis | zero pad], transposed -> (N, 128)
    R_all = jnp.concatenate(
        [J14, D431, Jpelvis, jnp.zeros((K_PAD - K_REG, N_VERTS), jnp.float32)], axis=0)
    R_allT = jnp.transpose(R_all)                                   # (N_VERTS, K_PAD)

    params = {
        # net head emits coordinate-major offsets: columns ordered [x..x | y..y | z..z]
        'w_net_cm': (jax.random.normal(ks[4], (C, 3, N_VERTS), jnp.float32) * 0.01
                     ).reshape(C, OUT3N),
        'init_verts_cm': jnp.transpose(init_verts).reshape(1, OUT3N),
        'R_allT': R_allT,
        'init_joints14': jnp.dot(J14, init_verts),
        'init_verts431': jnp.dot(D431, init_verts),
    }

    # deterministic example batch
    image = jax.random.normal(ks[5], (B, C, H, W_IMG), jnp.float32)
    K_cam = jnp.broadcast_to(
        jnp.array([[500.0, 0.0, 8.0], [0.0, 500.0, 8.0], [0.0, 0.0, 1.0]], jnp.float32),
        (B, 3, 3))
    bbx_lurb = jnp.broadcast_to(jnp.array([10.0, 20.0, 110.0, 120.0], jnp.float32), (B, 4))
    ang = 0.1
    Rm = jnp.array([[jnp.cos(ang), 0.0, jnp.sin(ang)],
                    [0.0, 1.0, 0.0],
                    [-jnp.sin(ang), 0.0, jnp.cos(ang)]], jnp.float32)
    T = jnp.eye(4, dtype=jnp.float32)
    T = T.at[:3, :3].set(Rm).at[:3, 3].set(jnp.array([0.1, -0.1, 5.0], jnp.float32))
    T_w2c = jnp.broadcast_to(T, (B, 4, 4))
    gt_w_verts = jax.random.normal(ks[6], (B, N_VERTS, 3), jnp.float32) * 0.2

    batch = {'image': image, 'K': K_cam, 'bbx_lurb': bbx_lurb,
             'T_w2c': T_w2c, 'gt_w_verts': gt_w_verts}

    out = network_wrapper_forward(batch, params)
    jax.block_until_ready(out['loss'])
    assert out['loss'].shape == (B,)
    print("KERNEL_OK")
</pallas_src>

<mosaic_0001>
module attributes {stable_mosaic.version = 11 : i64} {
  func.func @_fused_kernel(%arg0: memref<2x4x256xf32, #tpu.memory_space<vmem>>, %arg1: memref<4x1536xf32, #tpu.memory_space<vmem>>, %arg2: memref<1x1536xf32, #tpu.memory_space<vmem>>, %arg3: memref<512x128xf32, #tpu.memory_space<vmem>>, %arg4: memref<2x3x512xf32, #tpu.memory_space<vmem>>, %arg5: memref<2x4x4xf32, #tpu.memory_space<vmem>>, %arg6: memref<2x1xf32, #tpu.memory_space<vmem>>, %arg7: memref<2x1xf32, #tpu.memory_space<vmem>>, %arg8: memref<2x3x512xf32, #tpu.memory_space<vmem>>, %arg9: memref<2x3x512xf32, #tpu.memory_space<vmem>>, %arg10: memref<12x128xf32, #tpu.memory_space<vmem>>, %arg11: memref<12x512xf32, #tpu.memory_space<vmem>>) attributes {dimension_semantics = [], scalar_prefetch = 0 : i64, scratch_operands = 1 : i64, tpu.core_type = #tpu.core_type<tc>} {
    %c0 = arith.constant 0 : index
    %c0_0 = arith.constant 0 : index
    %c0_1 = arith.constant 0 : index
    %0 = vector.load %arg0[%c0, %c0_0, %c0_1] : memref<2x4x256xf32, #tpu.memory_space<vmem>>, vector<2x4x256xf32>
    %cst = arith.constant dense<0.000000e+00> : vector<2x4xf32>
    %1 = vector.multi_reduction <add>, %0, %cst [2] : vector<2x4x256xf32> to vector<2x4xf32>
    %cst_2 = arith.constant 2.560000e+02 : f32
    %2 = vector.broadcast %cst_2 : f32 to vector<2x4xf32>
    %3 = arith.divf %1, %2 : vector<2x4xf32>
    %c0_3 = arith.constant 0 : index
    %c0_4 = arith.constant 0 : index
    %4 = vector.load %arg1[%c0_3, %c0_4] : memref<4x1536xf32, #tpu.memory_space<vmem>>, vector<4x1536xf32>
    %cst_5 = arith.constant dense<0.000000e+00> : vector<2x1536xf32>
    %5 = tpu.matmul %3, %4, %cst_5 {dimension_numbers = #tpu.dot_dimension_numbers<[1], [0], [0], [1], [0, 0, 1, 1], [], []>} : vector<2x4xf32>, vector<4x1536xf32>, vector<2x1536xf32> -> vector<2x1536xf32>
    %c0_6 = arith.constant 0 : index
    %c0_7 = arith.constant 0 : index
    %6 = vector.load %arg2[%c0_6, %c0_7] : memref<1x1536xf32, #tpu.memory_space<vmem>>, vector<1x1536xf32>
    %7 = vector.broadcast %6 : vector<1x1536xf32> to vector<2x1536xf32>
    %8 = arith.addf %5, %7 : vector<2x1536xf32>
    %c0_8 = arith.constant 0 : index
    %c0_9 = arith.constant 0 : index
    %c0_10 = arith.constant 0 : index
    %9 = vector.load %arg5[%c0_8, %c0_9, %c0_10] : memref<2x4x4xf32, #tpu.memory_space<vmem>>, vector<2x4x4xf32>
    %c0_11 = arith.constant 0 : index
    %c0_12 = arith.constant 0 : index
    %c0_13 = arith.constant 0 : index
    %10 = vector.load %arg4[%c0_11, %c0_12, %c0_13] : memref<2x3x512xf32, #tpu.memory_space<vmem>>, vector<2x3x512xf32>
    %11 = vector.extract_strided_slice %8 {offsets = [0, 0], sizes = [2, 512], strides = [1, 1]} : vector<2x1536xf32> to vector<2x512xf32>
    %c0_14 = arith.constant 0 : index
    %c0_15 = arith.constant 0 : index
    %c0_16 = arith.constant 0 : index
    %12 = vector.load %arg8[%c0_14, %c0_15, %c0_16] : memref<2x3x512xf32, #tpu.memory_space<vmem>>, vector<2x1x512xf32>
    %13 = vector.shape_cast %12 : vector<2x1x512xf32> to vector<2x512xf32>
    %14 = vector.shape_cast %11 : vector<2x512xf32> to vector<2x1x512xf32>
    tpu.vector_store %arg8[%c0_14, %c0_15, %c0_16], %14 {strides = array<i32>} : memref<2x3x512xf32, #tpu.memory_space<vmem>>, vector<2x1x512xf32>,
    %c0_17 = arith.constant 0 : index
    %c0_18 = arith.constant 0 : index
    %15 = vector.load %arg11[%c0_17, %c0_18] : memref<12x512xf32, #tpu.memory_space<vmem>>, vector<2x512xf32>
    tpu.vector_store %arg11[%c0_17, %c0_18], %11 {strides = array<i32>} : memref<12x512xf32, #tpu.memory_space<vmem>>, vector<2x512xf32>,
    %16 = vector.extract_strided_slice %9 {offsets = [0, 0, 0], sizes = [2, 1, 1], strides = [1, 1, 1]} : vector<2x4x4xf32> to vector<2x1x1xf32>
    %17 = vector.shape_cast %16 : vector<2x1x1xf32> to vector<2x1xf32>
    %18 = vector.extract_strided_slice %10 {offsets = [0, 0, 0], sizes = [2, 1, 512], strides = [1, 1, 1]} : vector<2x3x512xf32> to vector<2x1x512xf32>
    %19 = vector.shape_cast %18 : vector<2x1x512xf32> to vector<2x512xf32>
    %20 = vector.broadcast %17 : vector<2x1xf32> to vector<2x512xf32>
    %21 = arith.mulf %20, %19 : vector<2x512xf32>
    %22 = vector.extract_strided_slice %9 {offsets = [0, 0, 1], sizes = [2, 1, 1], strides = [1, 1, 1]} : vector<2x4x4xf32> to vector<2x1x1xf32>
    %23 = vector.shape_cast %22 : vector<2x1x1xf32> to vector<2x1xf32>
    %24 = vector.extract_strided_slice %10 {offsets = [0, 1, 0], sizes = [2, 1, 512], strides = [1, 1, 1]} : vector<2x3x512xf32> to vector<2x1x512xf32>
    %25 = vector.shape_cast %24 : vector<2x1x512xf32> to vector<2x512xf32>
    %26 = vector.broadcast %23 : vector<2x1xf32> to vector<2x512xf32>
    %27 = arith.mulf %26, %25 : vector<2x512xf32>
    %28 = arith.addf %21, %27 : vector<2x512xf32>
    %29 = vector.extract_strided_slice %9 {offsets = [0, 0, 2], sizes = [2, 1, 1], strides = [1, 1, 1]} : vector<2x4x4xf32> to vector<2x1x1xf32>
    %30 = vector.shape_cast %29 : vector<2x1x1xf32> to vector<2x1xf32>
    %31 = vector.extract_strided_slice %10 {offsets = [0, 2, 0], sizes = [2, 1, 512], strides = [1, 1, 1]} : vector<2x3x512xf32> to vector<2x1x512xf32>
    %32 = vector.shape_cast %31 : vector<2x1x512xf32> to vector<2x512xf32>
    %33 = vector.broadcast %30 : vector<2x1xf32> to vector<2x512xf32>
    %34 = arith.mulf %33, %32 : vector<2x512xf32>
    %35 = arith.addf %28, %34 : vector<2x512xf32>
    %36 = vector.extract_strided_slice %9 {offsets = [0, 0, 3], sizes = [2, 1, 1], strides = [1, 1, 1]} : vector<2x4x4xf32> to vector<2x1x1xf32>
    %37 = vector.shape_cast %36 : vector<2x1x1xf32> to vector<2x1xf32>
    %38 = vector.broadcast %37 : vector<2x1xf32> to vector<2x512xf32>
    %39 = arith.addf %35, %38 : vector<2x512xf32>
    %c0_19 = arith.constant 0 : index
    %c0_20 = arith.constant 0 : index
    %c0_21 = arith.constant 0 : index
    %40 = vector.load %arg9[%c0_19, %c0_20, %c0_21] : memref<2x3x512xf32, #tpu.memory_space<vmem>>, vector<2x1x512xf32>
    %41 = vector.shape_cast %40 : vector<2x1x512xf32> to vector<2x512xf32>
    %42 = vector.shape_cast %39 : vector<2x512xf32> to vector<2x1x512xf32>
    tpu.vector_store %arg9[%c0_19, %c0_20, %c0_21], %42 {strides = array<i32>} : memref<2x3x512xf32, #tpu.memory_space<vmem>>, vector<2x1x512xf32>,
    %c6 = arith.constant 6 : index
    %c0_22 = arith.constant 0 : index
    %43 = vector.load %arg11[%c6, %c0_22] : memref<12x512xf32, #tpu.memory_space<vmem>>, vector<2x512xf32>
    tpu.vector_store %arg11[%c6, %c0_22], %39 {strides = array<i32>} : memref<12x512xf32, #tpu.memory_space<vmem>>, vector<2x512xf32>,
    %44 = vector.extract_strided_slice %8 {offsets = [0, 512], sizes = [2, 512], strides = [1, 1]} : vector<2x1536xf32> to vector<2x512xf32>
    %c0_23 = arith.constant 0 : index
    %c1 = arith.constant 1 : index
    %c0_24 = arith.constant 0 : index
    %45 = vector.load %arg8[%c0_23, %c1, %c0_24] : memref<2x3x512xf32, #tpu.memory_space<vmem>>, vector<2x1x512xf32>
    %46 = vector.shape_cast %45 : vector<2x1x512xf32> to vector<2x512xf32>
    %47 = vector.shape_cast %44 : vector<2x512xf32> to vector<2x1x512xf32>
    tpu.vector_store %arg8[%c0_23, %c1, %c0_24], %47 {strides = array<i32>} : memref<2x3x512xf32, #tpu.memory_space<vmem>>, vector<2x1x512xf32>,
    %c2 = arith.constant 2 : index
    %c0_25 = arith.constant 0 : index
    %48 = vector.load %arg11[%c2, %c0_25] : memref<12x512xf32, #tpu.memory_space<vmem>>, vector<2x512xf32>
    tpu.vector_store %arg11[%c2, %c0_25], %44 {strides = array<i32>} : memref<12x512xf32, #tpu.memory_space<vmem>>, vector<2x512xf32>,
    %49 = vector.extract_strided_slice %9 {offsets = [0, 1, 0], sizes = [2, 1, 1], strides = [1, 1, 1]} : vector<2x4x4xf32> to vector<2x1x1xf32>
    %50 = vector.shape_cast %49 : vector<2x1x1xf32> to vector<2x1xf32>
    %51 = vector.extract_strided_slice %10 {offsets = [0, 0, 0], sizes = [2, 1, 512], strides = [1, 1, 1]} : vector<2x3x512xf32> to vector<2x1x512xf32>
    %52 = vector.shape_cast %51 : vector<2x1x512xf32> to vector<2x512xf32>
    %53 = vector.broadcast %50 : vector<2x1xf32> to vector<2x512xf32>
    %54 = arith.mulf %53, %52 : vector<2x512xf32>
    %55 = vector.extract_strided_slice %9 {offsets = [0, 1, 1], sizes = [2, 1, 1], strides = [1, 1, 1]} : vector<2x4x4xf32> to vector<2x1x1xf32>
    %56 = vector.shape_cast %55 : vector<2x1x1xf32> to vector<2x1xf32>
    %57 = vector.extract_strided_slice %10 {offsets = [0, 1, 0], sizes = [2, 1, 512], strides = [1, 1, 1]} : vector<2x3x512xf32> to vector<2x1x512xf32>
    %58 = vector.shape_cast %57 : vector<2x1x512xf32> to vector<2x512xf32>
    %59 = vector.broadcast %56 : vector<2x1xf32> to vector<2x512xf32>
    %60 = arith.mulf %59, %58 : vector<2x512xf32>
    %61 = arith.addf %54, %60 : vector<2x512xf32>
    %62 = vector.extract_strided_slice %9 {offsets = [0, 1, 2], sizes = [2, 1, 1], strides = [1, 1, 1]} : vector<2x4x4xf32> to vector<2x1x1xf32>
    %63 = vector.shape_cast %62 : vector<2x1x1xf32> to vector<2x1xf32>
    %64 = vector.extract_strided_slice %10 {offsets = [0, 2, 0], sizes = [2, 1, 512], strides = [1, 1, 1]} : vector<2x3x512xf32> to vector<2x1x512xf32>
    %65 = vector.shape_cast %64 : vector<2x1x512xf32> to vector<2x512xf32>
    %66 = vector.broadcast %63 : vector<2x1xf32> to vector<2x512xf32>
    %67 = arith.mulf %66, %65 : vector<2x512xf32>
    %68 = arith.addf %61, %67 : vector<2x512xf32>
    %69 = vector.extract_strided_slice %9 {offsets = [0, 1, 3], sizes = [2, 1, 1], strides = [1, 1, 1]} : vector<2x4x4xf32> to vector<2x1x1xf32>
    %70 = vector.shape_cast %69 : vector<2x1x1xf32> to vector<2x1xf32>
    %71 = vector.broadcast %70 : vector<2x1xf32> to vector<2x512xf32>
    %72 = arith.addf %68, %71 : vector<2x512xf32>
    %c0_26 = arith.constant 0 : index
    %c1_27 = arith.constant 1 : index
    %c0_28 = arith.constant 0 : index
    %73 = vector.load %arg9[%c0_26, %c1_27, %c0_28] : memref<2x3x512xf32, #tpu.memory_space<vmem>>, vector<2x1x512xf32>
    %74 = vector.shape_cast %73 : vector<2x1x512xf32> to vector<2x512xf32>
    %75 = vector.shape_cast %72 : vector<2x512xf32> to vector<2x1x512xf32>
    tpu.vector_store %arg9[%c0_26, %c1_27, %c0_28], %75 {strides = array<i32>} : memref<2x3x512xf32, #tpu.memory_space<vmem>>, vector<2x1x512xf32>,
    %c8 = arith.constant 8 : index
    %c0_29 = arith.constant 0 : index
    %76 = vector.load %arg11[%c8, %c0_29] : memref<12x512xf32, #tpu.memory_space<vmem>>, vector<2x512xf32>
    tpu.vector_store %arg11[%c8, %c0_29], %72 {strides = array<i32>} : memref<12x512xf32, #tpu.memory_space<vmem>>, vector<2x512xf32>,
    %77 = vector.extract_strided_slice %8 {offsets = [0, 1024], sizes = [2, 512], strides = [1, 1]} : vector<2x1536xf32> to vector<2x512xf32>
    %c0_30 = arith.constant 0 : index
    %c2_31 = arith.constant 2 : index
    %c0_32 = arith.constant 0 : index
    %78 = vector.load %arg8[%c0_30, %c2_31, %c0_32] : memref<2x3x512xf32, #tpu.memory_space<vmem>>, vector<2x1x512xf32>
    %79 = vector.shape_cast %78 : vector<2x1x512xf32> to vector<2x512xf32>
    %80 = vector.shape_cast %77 : vector<2x512xf32> to vector<2x1x512xf32>
    tpu.vector_store %arg8[%c0_30, %c2_31, %c0_32], %80 {strides = array<i32>} : memref<2x3x512xf32, #tpu.memory_space<vmem>>, vector<2x1x512xf32>,
    %c4 = arith.constant 4 : index
    %c0_33 = arith.constant 0 : index
    %81 = vector.load %arg11[%c4, %c0_33] : memref<12x512xf32, #tpu.memory_space<vmem>>, vector<2x512xf32>
    tpu.vector_store %arg11[%c4, %c0_33], %77 {strides = array<i32>} : memref<12x512xf32, #tpu.memory_space<vmem>>, vector<2x512xf32>,
    %82 = vector.extract_strided_slice %9 {offsets = [0, 2, 0], sizes = [2, 1, 1], strides = [1, 1, 1]} : vector<2x4x4xf32> to vector<2x1x1xf32>
    %83 = vector.shape_cast %82 : vector<2x1x1xf32> to vector<2x1xf32>
    %84 = vector.extract_strided_slice %10 {offsets = [0, 0, 0], sizes = [2, 1, 512], strides = [1, 1, 1]} : vector<2x3x512xf32> to vector<2x1x512xf32>
    %85 = vector.shape_cast %84 : vector<2x1x512xf32> to vector<2x512xf32>
    %86 = vector.broadcast %83 : vector<2x1xf32> to vector<2x512xf32>
    %87 = arith.mulf %86, %85 : vector<2x512xf32>
    %88 = vector.extract_strided_slice %9 {offsets = [0, 2, 1], sizes = [2, 1, 1], strides = [1, 1, 1]} : vector<2x4x4xf32> to vector<2x1x1xf32>
    %89 = vector.shape_cast %88 : vector<2x1x1xf32> to vector<2x1xf32>
    %90 = vector.extract_strided_slice %10 {offsets = [0, 1, 0], sizes = [2, 1, 512], strides = [1, 1, 1]} : vector<2x3x512xf32> to vector<2x1x512xf32>
    %91 = vector.shape_cast %90 : vector<2x1x512xf32> to vector<2x512xf32>
    %92 = vector.broadcast %89 : vector<2x1xf32> to vector<2x512xf32>
    %93 = arith.mulf %92, %91 : vector<2x512xf32>
    %94 = arith.addf %87, %93 : vector<2x512xf32>
    %95 = vector.extract_strided_slice %9 {offsets = [0, 2, 2], sizes = [2, 1, 1], strides = [1, 1, 1]} : vector<2x4x4xf32> to vector<2x1x1xf32>
    %96 = vector.shape_cast %95 : vector<2x1x1xf32> to vector<2x1xf32>
    %97 = vector.extract_strided_slice %10 {offsets = [0, 2, 0], sizes = [2, 1, 512], strides = [1, 1, 1]} : vector<2x3x512xf32> to vector<2x1x512xf32>
    %98 = vector.shape_cast %97 : vector<2x1x512xf32> to vector<2x512xf32>
    %99 = vector.broadcast %96 : vector<2x1xf32> to vector<2x512xf32>
    %100 = arith.mulf %99, %98 : vector<2x512xf32>
    %101 = arith.addf %94, %100 : vector<2x512xf32>
    %102 = vector.extract_strided_slice %9 {offsets = [0, 2, 3], sizes = [2, 1, 1], strides = [1, 1, 1]} : vector<2x4x4xf32> to vector<2x1x1xf32>
    %103 = vector.shape_cast %102 : vector<2x1x1xf32> to vector<2x1xf32>
    %104 = vector.broadcast %103 : vector<2x1xf32> to vector<2x512xf32>
    %105 = arith.addf %101, %104 : vector<2x512xf32>
    %c0_34 = arith.constant 0 : index
    %c2_35 = arith.constant 2 : index
    %c0_36 = arith.constant 0 : index
    %106 = vector.load %arg9[%c0_34, %c2_35, %c0_36] : memref<2x3x512xf32, #tpu.memory_space<vmem>>, vector<2x1x512xf32>
    %107 = vector.shape_cast %106 : vector<2x1x512xf32> to vector<2x512xf32>
    %108 = vector.shape_cast %105 : vector<2x512xf32> to vector<2x1x512xf32>
    tpu.vector_store %arg9[%c0_34, %c2_35, %c0_36], %108 {strides = array<i32>} : memref<2x3x512xf32, #tpu.memory_space<vmem>>, vector<2x1x512xf32>,
    %c10 = arith.constant 10 : index
    %c0_37 = arith.constant 0 : index
    %109 = vector.load %arg11[%c10, %c0_37] : memref<12x512xf32, #tpu.memory_space<vmem>>, vector<2x512xf32>
    tpu.vector_store %arg11[%c10, %c0_37], %105 {strides = array<i32>} : memref<12x512xf32, #tpu.memory_space<vmem>>, vector<2x512xf32>,
    %c0_38 = arith.constant 0 : index
    %c0_39 = arith.constant 0 : index
    %110 = vector.load %arg11[%c0_38, %c0_39] : memref<12x512xf32, #tpu.memory_space<vmem>>, vector<12x512xf32>
    %c0_40 = arith.constant 0 : index
    %c0_41 = arith.constant 0 : index
    %111 = vector.load %arg3[%c0_40, %c0_41] : memref<512x128xf32, #tpu.memory_space<vmem>>, vector<512x128xf32>
    %cst_42 = arith.constant dense<0.000000e+00> : vector<12x128xf32>
    %112 = tpu.matmul %110, %111, %cst_42 {dimension_numbers = #tpu.dot_dimension_numbers<[1], [0], [0], [1], [0, 0, 1, 1], [], []>} : vector<12x512xf32>, vector<512x128xf32>, vector<12x128xf32> -> vector<12x128xf32>
    %c0_43 = arith.constant 0 : index
    %c0_44 = arith.constant 0 : index
    %113 = vector.load %arg10[%c0_43, %c0_44] : memref<12x128xf32, #tpu.memory_space<vmem>>, vector<12x128xf32>
    tpu.vector_store %arg10[%c0_43, %c0_44], %112 {strides = array<i32>} : memref<12x128xf32, #tpu.memory_space<vmem>>, vector<12x128xf32>,
    %114 = vector.extract_strided_slice %112 {offsets = [0, 0], sizes = [2, 128], strides = [1, 1]} : vector<12x128xf32> to vector<2x128xf32>
    %115 = vector.extract_strided_slice %112 {offsets = [2, 0], sizes = [2, 128], strides = [1, 1]} : vector<12x128xf32> to vector<2x128xf32>
    %116 = vector.extract_strided_slice %112 {offsets = [4, 0], sizes = [2, 128], strides = [1, 1]} : vector<12x128xf32> to vector<2x128xf32>
    %117 = vector.extract_strided_slice %112 {offsets = [6, 0], sizes = [2, 128], strides = [1, 1]} : vector<12x128xf32> to vector<2x128xf32>
    %118 = vector.extract_strided_slice %112 {offsets = [8, 0], sizes = [2, 128], strides = [1, 1]} : vector<12x128xf32> to vector<2x128xf32>
    %119 = vector.extract_strided_slice %112 {offsets = [10, 0], sizes = [2, 128], strides = [1, 1]} : vector<12x128xf32> to vector<2x128xf32>
    %120 = arith.subf %114, %117 : vector<2x128xf32>
    %121 = math.absf %120 : vector<2x128xf32>
    %122 = arith.subf %115, %118 : vector<2x128xf32>
    %123 = math.absf %122 : vector<2x128xf32>
    %124 = arith.addf %121, %123 : vector<2x128xf32>
    %125 = arith.subf %116, %119 : vector<2x128xf32>
    %126 = math.absf %125 : vector<2x128xf32>
    %127 = arith.addf %124, %126 : vector<2x128xf32>
    %128 = vector.extract_strided_slice %127 {offsets = [0, 0], sizes = [2, 14], strides = [1, 1]} : vector<2x128xf32> to vector<2x14xf32>
    %cst_45 = arith.constant dense<0.000000e+00> : vector<2xf32>
    %129 = vector.multi_reduction <add>, %128, %cst_45 [1] : vector<2x14xf32> to vector<2xf32>
    %130 = vector.shape_cast %129 : vector<2xf32> to vector<2x1xf32>
    %cst_46 = arith.constant 4.200000e+01 : f32
    %131 = vector.broadcast %cst_46 : f32 to vector<2x1xf32>
    %132 = arith.divf %130, %131 : vector<2x1xf32>
    %133 = vector.extract_strided_slice %127 {offsets = [0, 14], sizes = [2, 64], strides = [1, 1]} : vector<2x128xf32> to vector<2x64xf32>
    %cst_47 = arith.constant dense<0.000000e+00> : vector<2xf32>
    %134 = vector.multi_reduction <add>, %133, %cst_47 [1] : vector<2x64xf32> to vector<2xf32>
    %135 = vector.shape_cast %134 : vector<2xf32> to vector<2x1xf32>
    %cst_48 = arith.constant 1.920000e+02 : f32
    %136 = vector.broadcast %cst_48 : f32 to vector<2x1xf32>
    %137 = arith.divf %135, %136 : vector<2x1xf32>
    %138 = vector.extract_strided_slice %127 {offsets = [0, 78], sizes = [2, 1], strides = [1, 1]} : vector<2x128xf32> to vector<2x1xf32>
    %cst_49 = arith.constant 3.000000e+00 : f32
    %139 = vector.broadcast %cst_49 : f32 to vector<2x1xf32>
    %140 = arith.divf %138, %139 : vector<2x1xf32>
    %c0_50 = arith.constant 0 : index
    %c0_51 = arith.constant 0 : index
    %141 = vector.load %arg6[%c0_50, %c0_51] : memref<2x1xf32, #tpu.memory_space<vmem>>, vector<2x1xf32>
    %142 = vector.extract_strided_slice %116 {offsets = [0, 0], sizes = [2, 14], strides = [1, 1]} : vector<2x128xf32> to vector<2x14xf32>
    %143 = tpu.reciprocal %142 {approx = true} : vector<2x14xf32> -> vector<2x14xf32>
    %144 = vector.extract_strided_slice %119 {offsets = [0, 0], sizes = [2, 14], strides = [1, 1]} : vector<2x128xf32> to vector<2x14xf32>
    %145 = tpu.reciprocal %144 {approx = true} : vector<2x14xf32> -> vector<2x14xf32>
    %146 = vector.extract_strided_slice %114 {offsets = [0, 0], sizes = [2, 14], strides = [1, 1]} : vector<2x128xf32> to vector<2x14xf32>
    %147 = arith.mulf %146, %143 : vector<2x14xf32>
    %148 = vector.broadcast %141 : vector<2x1xf32> to vector<2x14xf32>
    %149 = arith.mulf %147, %148 : vector<2x14xf32>
    %cst_52 = arith.constant 8.000000e+00 : f32
    %150 = vector.broadcast %cst_52 : f32 to vector<2x14xf32>
    %151 = arith.addf %149, %150 : vector<2x14xf32>
    %152 = vector.extract_strided_slice %115 {offsets = [0, 0], sizes = [2, 14], strides = [1, 1]} : vector<2x128xf32> to vector<2x14xf32>
    %153 = arith.mulf %152, %143 : vector<2x14xf32>
    %154 = vector.broadcast %141 : vector<2x1xf32> to vector<2x14xf32>
    %155 = arith.mulf %153, %154 : vector<2x14xf32>
    %cst_53 = arith.constant 8.000000e+00 : f32
    %156 = vector.broadcast %cst_53 : f32 to vector<2x14xf32>
    %157 = arith.addf %155, %156 : vector<2x14xf32>
    %158 = vector.extract_strided_slice %117 {offsets = [0, 0], sizes = [2, 14], strides = [1, 1]} : vector<2x128xf32> to vector<2x14xf32>
    %159 = arith.mulf %158, %145 : vector<2x14xf32>
    %160 = vector.broadcast %141 : vector<2x1xf32> to vector<2x14xf32>
    %161 = arith.mulf %159, %160 : vector<2x14xf32>
    %cst_54 = arith.constant 8.000000e+00 : f32
    %162 = vector.broadcast %cst_54 : f32 to vector<2x14xf32>
    %163 = arith.addf %161, %162 : vector<2x14xf32>
    %164 = vector.extract_strided_slice %118 {offsets = [0, 0], sizes = [2, 14], strides = [1, 1]} : vector<2x128xf32> to vector<2x14xf32>
    %165 = arith.mulf %164, %145 : vector<2x14xf32>
    %166 = vector.broadcast %141 : vector<2x1xf32> to vector<2x14xf32>
    %167 = arith.mulf %165, %166 : vector<2x14xf32>
    %cst_55 = arith.constant 8.000000e+00 : f32
    %168 = vector.broadcast %cst_55 : f32 to vector<2x14xf32>
    %169 = arith.addf %167, %168 : vector<2x14xf32>
    %170 = arith.subf %151, %163 : vector<2x14xf32>
    %171 = math.absf %170 : vector<2x14xf32>
    %cst_56 = arith.constant dense<0.000000e+00> : vector<2xf32>
    %172 = vector.multi_reduction <add>, %171, %cst_56 [1] : vector<2x14xf32> to vector<2xf32>
    %173 = vector.shape_cast %172 : vector<2xf32> to vector<2x1xf32>
    %174 = arith.subf %157, %169 : vector<2x14xf32>
    %175 = math.absf %174 : vector<2x14xf32>
    %cst_57 = arith.constant dense<0.000000e+00> : vector<2xf32>
    %176 = vector.multi_reduction <add>, %175, %cst_57 [1] : vector<2x14xf32> to vector<2xf32>
    %177 = vector.shape_cast %176 : vector<2xf32> to vector<2x1xf32>
    %178 = arith.addf %173, %177 : vector<2x1xf32>
    %cst_58 = arith.constant 2.800000e+01 : f32
    %179 = vector.broadcast %cst_58 : f32 to vector<2x1xf32>
    %180 = arith.divf %178, %179 : vector<2x1xf32>
    %cst_59 = arith.constant 1.000000e+00 : f32
    %181 = vector.broadcast %cst_59 : f32 to vector<2x1xf32>
    %182 = arith.mulf %181, %137 : vector<2x1xf32>
    %cst_60 = arith.constant 1.000000e+00 : f32
    %183 = vector.broadcast %cst_60 : f32 to vector<2x1xf32>
    %184 = arith.mulf %183, %132 : vector<2x1xf32>
    %185 = arith.addf %182, %184 : vector<2x1xf32>
    %cst_61 = arith.constant 5.000000e-01 : f32
    %186 = vector.broadcast %cst_61 : f32 to vector<2x1xf32>
    %187 = arith.mulf %186, %140 : vector<2x1xf32>
    %188 = arith.addf %185, %187 : vector<2x1xf32>
    %cst_62 = arith.constant 0.00999999977 : f32
    %189 = vector.broadcast %cst_62 : f32 to vector<2x1xf32>
    %190 = arith.mulf %189, %180 : vector<2x1xf32>
    %191 = arith.addf %188, %190 : vector<2x1xf32>
    %c0_63 = arith.constant 0 : index
    %c0_64 = arith.constant 0 : index
    %192 = vector.load %arg7[%c0_63, %c0_64] : memref<2x1xf32, #tpu.memory_space<vmem>>, vector<2x1xf32>
    tpu.vector_store %arg7[%c0_63, %c0_64], %191 {strides = array<i32>} : memref<2x1xf32, #tpu.memory_space<vmem>>, vector<2x1xf32>,
    return
  }
}

</mosaic_0001>

<llo_original>
// kernel: tpu_custom_call.1
$region0: #{tpu_custom_call.1}
  #allocation0 [shape = 'u32[]', space=smem, size = 0x4, offset = 0x4, fixed_abs, tag = 'smem constant byte address 0x4 - core index']
  #allocation1 [shape = 'u32[144,128]{1,0:T(1,128)}', space=vmem, size = 0x12000, scoped, tag = 'internal scratch']
  #allocation2 [shape = 'f32[12,512]{1,0:T(8,128)}', space=vmem, size = 0x8000, scoped, tag = 'scratch operand']
  %s0 = inlined_call_operand.hbm [shape: f32[2,4,256], index: 0, kind: input, shape index: {}]
  %s1 = inlined_call_operand.vmem [shape: f32[4,1536], index: 1, kind: input, shape index: {}]
  %s2 = inlined_call_operand.vmem [shape: f32[1,1536], index: 2, kind: input, shape index: {}]
  %s3 = inlined_call_operand.hbm [shape: f32[512,128], index: 3, kind: input, shape index: {}]
  %s4 = inlined_call_operand.vmem [shape: f32[2,3,512], index: 4, kind: input, shape index: {}]
  %s5 = inlined_call_operand.vmem [shape: f32[2,4,4], index: 5, kind: input, shape index: {}]
  %s6 = inlined_call_operand.vmem [shape: f32[2,1], index: 6, kind: input, shape index: {}]
  %s7 = inlined_call_operand.vmem [shape: f32[2,1], index: 7, kind: output, shape index: {0}]
  %s8 = inlined_call_operand.vmem [shape: f32[2,3,512], index: 8, kind: output, shape index: {1}]
  %s9 = inlined_call_operand.vmem [shape: f32[2,3,512], index: 9, kind: output, shape index: {2}]
  %s10 = inlined_call_operand.hbm [shape: f32[12,128], index: 10, kind: output, shape index: {3}]
  %11 = xla_tuple %s7, %s8, %s9, %s10
  %s12 = sld [smem:[#allocation0]]
  $region70: #{tpu_custom_call.1} parent=0
    _
  %s14 = ssub.s32 1, %s12
  %s15 = scalar_select 0, %s14, %s12
  $region1: #{tpu_custom_call.1} parent=0
    #allocation3 [shape = 'u8[8192]{0}', space=vmem, size = 0x2000, scoped, tag = 'input window, operand 0, single buffered']
    #allocation4 [shape = 's32[1]{0}', space=sflag, size = 0x4, scoped, tag = 'scoped memory for tpu_custom_call.1']
    #allocation5 [shape = 's32[1]{0}', space=sflag, size = 0x4, scoped, tag = 'scoped memory for tpu_custom_call.1']
    #allocation6 [shape = 'u8[262144]{0}', space=vmem, size = 0x40000, scoped, tag = 'input window, operand 3, single buffered']
    #allocation7 [shape = 's32[1]{0}', space=sflag, size = 0x4, scoped, tag = 'scoped memory for tpu_custom_call.1']
    #allocation8 [shape = 'u8[8192]{0}', space=vmem, size = 0x2000, scoped, tag = 'output window, operand 3, single buffered']
    %16 = vsyncpa [#allocation4], 0
    %17 = vsyncpa [#allocation7], 0
    %18 = vsyncpa [#allocation5], 0
    // Predicated region
    $region2: #{tpu_custom_call.1} parent=1 // pred_check
      _
    $region3: #{tpu_custom_call.1} parent=1 // pred_check_branch
      %20 = sbr.rel (0) target = $region5
    $region4: #{tpu_custom_call.1} parent=1 // pred_region
      %s22 = ssub.s32 256, 256
      %23 = vsyncadd [#allocation4], %s22
      %s24 = sshll.u32 [#allocation3], 4
      %s25 = int_to_ptr.vmem [resolvable:$true] %s24
      %30 = dma.hbm_to_vmem [thread:$0]  %s0, 256, %s25, [#allocation4], 128, 128, 8
    $region5: #{tpu_custom_call.1} parent=1 // pred_fallthru
      _
    // Predicated region
    $region6: #{tpu_custom_call.1} parent=1 // pred_check
      _
    $region7: #{tpu_custom_call.1} parent=1 // pred_check_branch
      %32 = sbr.rel (0) target = $region9
    $region8: #{tpu_custom_call.1} parent=1 // pred_region
      _
    $region9: #{tpu_custom_call.1} parent=1 // pred_fallthru
      _
    // Predicated region
    $region10: #{tpu_custom_call.1} parent=1 // pred_check
      _
    $region11: #{tpu_custom_call.1} parent=1 // pred_check_branch
      %34 = sbr.rel (0) target = $region13
    $region12: #{tpu_custom_call.1} parent=1 // pred_region
      _
    $region13: #{tpu_custom_call.1} parent=1 // pred_fallthru
      _
    // Predicated region
    $region14: #{tpu_custom_call.1} parent=1 // pred_check
      _
    $region15: #{tpu_custom_call.1} parent=1 // pred_check_branch
      %36 = sbr.rel (0) target = $region17
    $region16: #{tpu_custom_call.1} parent=1 // pred_region
      %s38 = ssub.s32 8192, 8192
      %39 = vsyncadd [#allocation7], %s38
      %s40 = sshll.u32 [#allocation6], 4
      %s41 = int_to_ptr.vmem [resolvable:$true] %s40
      %46 = dma.hbm_to_vmem [thread:$0]  %s3, 8192, %s41, [#allocation7], 128, 128, 8
    $region17: #{tpu_custom_call.1} parent=1 // pred_fallthru
      _
    // Predicated region
    $region18: #{tpu_custom_call.1} parent=1 // pred_check
      _
    $region19: #{tpu_custom_call.1} parent=1 // pred_check_branch
      %48 = sbr.rel (0) target = $region21
    $region20: #{tpu_custom_call.1} parent=1 // pred_region
      _
    $region21: #{tpu_custom_call.1} parent=1 // pred_fallthru
      _
    // Predicated region
    $region22: #{tpu_custom_call.1} parent=1 // pred_check
      _
    $region23: #{tpu_custom_call.1} parent=1 // pred_check_branch
      %50 = sbr.rel (0) target = $region25
    $region24: #{tpu_custom_call.1} parent=1 // pred_region
      _
    $region25: #{tpu_custom_call.1} parent=1 // pred_fallthru
      _
    // Predicated region
    $region26: #{tpu_custom_call.1} parent=1 // pred_check
      _
    $region27: #{tpu_custom_call.1} parent=1 // pred_check_branch
      %52 = sbr.rel (0) target = $region29
    $region28: #{tpu_custom_call.1} parent=1 // pred_region
      _
    $region29: #{tpu_custom_call.1} parent=1 // pred_fallthru
      _
    // Predicated region
    $region30: #{tpu_custom_call.1} parent=1 // pred_check
      _
    $region31: #{tpu_custom_call.1} parent=1 // pred_check_branch
      %54 = sbr.rel (0) target = $region33
    $region32: #{tpu_custom_call.1} parent=1 // pred_region
      %55 = dma.done [#allocation4], 256
    $region33: #{tpu_custom_call.1} parent=1 // pred_fallthru
      _
    // Predicated region
    $region34: #{tpu_custom_call.1} parent=1 // pred_check
      _
    $region35: #{tpu_custom_call.1} parent=1 // pred_check_branch
      %57 = sbr.rel (0) target = $region37
    $region36: #{tpu_custom_call.1} parent=1 // pred_region
      %58 = dma.done [#allocation7], 8192
    $region37: #{tpu_custom_call.1} parent=1 // pred_fallthru
      _
    %v59 = vld [vmem:[#allocation3] sm:$0xff]
    %v60 = vld [vmem:[#allocation3 + $0x8] sm:$0xff]
    %v63 = vcombine.high %v59, %v59
    %v64 = vcombine.high %v60, %v60
    %vm67 = vcmask 1043456
    %v68 = vsel %vm67, %v59, 0.0
    %v69 = vsel %vm67, %v63, 0.0
    %v70 = vadd.f32 %v68, %v69
    %71 = vadd.xlane.f32.xlu0 %v70
    %v72 = vpop.xlane.xlu0 %71
    %v73 = vsel %vm67, %v60, 0.0
    %v74 = vsel %vm67, %v64, 0.0
    %v75 = vadd.f32 %v73, %v74
    %76 = vadd.xlane.f32.xlu0 %v75
    %v77 = vpop.xlane.xlu0 %76
    %v78 = vrcp.pop 256.0
    %v79 = vmul.f32 %v72, %v78
    %v80 = vmul.f32 %v77, %v78
    %v81 = vld [vmem:[%s1] sm:$0xff]
    %v82 = vld [vmem:[%s1 + $0x8] sm:$0xff]
    %v83 = vld [vmem:[%s1 + $0x10] sm:$0xff]
    %v84 = vld [vmem:[%s1 + $0x18] sm:$0xff]
    %v85 = vld [vmem:[%s1 + $0x20] sm:$0xff]
    %v86 = vld [vmem:[%s1 + $0x28] sm:$0xff]
    %v87 = vld [vmem:[%s2] sm:$0xff]
    %v88 = vld [vmem:[%s2 + $0x8] sm:$0xf]
    %v91 = vlaneseq
    %v92 = vshrl.u32 %v91, 7
    %v93 = vsub.s32 0, %v92
    %v94 = vrot.slane %v87, %v93
    %v95 = vlaneseq
    %v96 = vshrl.u32 %v95, 7
    %v97 = vsub.s32 1, %v96
    %v98 = vrot.slane %v87, %v97
    %v99 = vlaneseq
    %v100 = vshrl.u32 %v99, 7
    %v101 = vsub.s32 2, %v100
    %v102 = vrot.slane %v87, %v101
    %v103 = vlaneseq
    %v104 = vshrl.u32 %v103, 7
    %v105 = vsub.s32 3, %v104
    %v106 = vrot.slane %v87, %v105
    %v107 = vlaneseq
    %v108 = vshrl.u32 %v107, 7
    %v109 = vsub.s32 4, %v108
    %v110 = vrot.slane %v87, %v109
    %v111 = vlaneseq
    %v112 = vshrl.u32 %v111, 7
    %v113 = vsub.s32 5, %v112
    %v114 = vrot.slane %v87, %v113
    %v115 = vlaneseq
    %v116 = vshrl.u32 %v115, 7
    %v117 = vsub.s32 6, %v116
    %v118 = vrot.slane %v87, %v117
    %v119 = vlaneseq
    %v120 = vshrl.u32 %v119, 7
    %v121 = vsub.s32 7, %v120
    %v122 = vrot.slane %v87, %v121
    %v123 = vlaneseq
    %v124 = vshrl.u32 %v123, 7
    %v125 = vsub.s32 0, %v124
    %v126 = vrot.slane %v88, %v125
    %v127 = vlaneseq
    %v128 = vshrl.u32 %v127, 7
    %v129 = vsub.s32 1, %v128
    %v130 = vrot.slane %v88, %v129
    %v131 = vlaneseq
    %v132 = vshrl.u32 %v131, 7
    %v133 = vsub.s32 2, %v132
    %v134 = vrot.slane %v88, %v133
    %v135 = vlaneseq
    %v136 = vshrl.u32 %v135, 7
    %v137 = vsub.s32 3, %v136
    %v138 = vrot.slane %v88, %v137
    %v153 = vlaneseq
    %v154 = vand.u32 %v153, 127
    %v155 = vlaneseq
    %v156 = vshrl.u32 %v155, 7
    %v157 = vsub.s32 %v154, %v156
    %v158 = vrot.slane %v79, %v157
    %v159 = vlaneseq
    %v160 = vshrl.u32 %v159, 7
    %v161 = vsub.s32 %v154, %v160
    %v162 = vrot.slane %v80, %v161
    %vm163 = vcmask 1041409
    %v164 = vsel %vm163, %v162, %v158
    %v171 = vcombine.high %v81, %v81
    %v172 = vcombine.high %v82, %v82
    %v173 = vcombine.high %v83, %v83
    %v174 = vcombine.high %v84, %v84
    %v175 = vcombine.high %v85, %v85
    %v176 = vcombine.high %v86, %v86
    %vm177 = vcmask 31744
    %v178 = vsel %vm177, %v164, 0
    %v180 = vsel %vm67, %v81, 0
    %v182 = vsel %vm67, %v171, 0
    %v184 = vsel %vm67, %v82, 0
    %v186 = vsel %vm67, %v172, 0
    %v188 = vsel %vm67, %v83, 0
    %v190 = vsel %vm67, %v173, 0
    %v192 = vsel %vm67, %v84, 0
    %v194 = vsel %vm67, %v174, 0
    %v196 = vsel %vm67, %v85, 0
    %v198 = vsel %vm67, %v175, 0
    %v200 = vsel %vm67, %v86, 0
    %v202 = vsel %vm67, %v176, 0
    %204 = vmatprep.subr.mxu0 0.0
    %205 = vmatpush1.msra.mxu0 0.0
    %206 = vmatprep.subr.mxu0 0.0
    %207 = vmatpush1.msra.mxu0 0.0
    %208 = vmatprep.subr.mxu0 0.0
    %209 = vmatpush1.msra.mxu0 0.0
    %210 = vmatprep.subr.mxu0 0.0
    %211 = vmatpush1.msra.mxu0 0.0
    %212 = vmatprep.subr.mxu0 0.0
    %213 = vmatpush1.msra.mxu0 0.0
    %214 = vmatprep.subr.mxu0 0.0
    %215 = vmatpush1.msra.mxu0 0.0
    %216 = vmatprep.subr.mxu0 0.0
    %217 = vmatpush1.msra.mxu0 0.0
    %218 = vmatprep.subr.mxu0 0.0
    %219 = vmatpush1.msra.mxu0 0.0
    %220 = vmatprep.subr.mxu0 0.0
    %221 = vmatpush1.msra.mxu0 0.0
    %222 = vmatprep.subr.mxu0 0.0
    %223 = vmatpush1.msra.mxu0 0.0
    %224 = vmatprep.subr.mxu0 0.0
    %225 = vmatpush1.msra.mxu0 0.0
    %226 = vmatprep.subr.mxu0 0.0
    %227 = vmatpush1.msra.mxu0 0.0
    %228 = vmatprep.subr.mxu0 0.0
    %229 = vmatpush1.msra.mxu0 0.0
    %230 = vmatprep.subr.mxu0 0.0
    %231 = vmatpush1.msra.mxu0 0.0
    %232 = vmatprep.subr.mxu0 0.0
    %233 = vmatpush1.msra.mxu0 0.0
    %234 = vmatprep.subr.mxu0 %v182
    %235 = vmatpush1.msra.mxu0 %v180
    %236 = vmatprep.subr.mxu0 0.0
    %237 = vmatpush2.msra.mxu0 0.0
    %238 = vmatprep.subr.mxu0 0.0
    %239 = vmatpush2.msra.mxu0 0.0
    %240 = vmatprep.subr.mxu0 0.0
    %241 = vmatpush2.msra.mxu0 0.0
    %242 = vmatprep.subr.mxu0 0.0
    %243 = vmatpush2.msra.mxu0 0.0
    %244 = vmatprep.subr.mxu0 0.0
    %245 = vmatpush2.msra.mxu0 0.0
    %246 = vmatprep.subr.mxu0 0.0
    %247 = vmatpush2.msra.mxu0 0.0
    %248 = vmatprep.subr.mxu0 0.0
    %249 = vmatpush2.msra.mxu0 0.0
    %250 = vmatprep.subr.mxu0 0.0
    %251 = vmatpush2.msra.mxu0 0.0
    %252 = vmatprep.subr.mxu0 0.0
    %253 = vmatpush2.msra.mxu0 0.0
    %254 = vmatprep.subr.mxu0 0.0
    %255 = vmatpush2.msra.mxu0 0.0
    %256 = vmatprep.subr.mxu0 0.0
    %257 = vmatpush2.msra.mxu0 0.0
    %258 = vmatprep.subr.mxu0 0.0
    %259 = vmatpush2.msra.mxu0 0.0
    %260 = vmatprep.subr.mxu0 0.0
    %261 = vmatpush2.msra.mxu0 0.0
    %262 = vmatprep.subr.mxu0 0.0
    %263 = vmatpush2.msra.mxu0 0.0
    %264 = vmatprep.subr.mxu0 0.0
    %265 = vmatpush2.msra.mxu0 0.0
    %266 = vmatprep.subr.mxu0 0.0
    %267 = vmatpush2.msra.mxu0 0.0
    %268 = vmatprep.mubr.f32.mxu0 0.0
    %269 = vmatmul.mubr.f32.gmra.mxu0 %v178
    %v270 = vpop.f32.mrf.mxu0
    %v271 = vadd.f32 %v94, %v270
    %v272 = vpop.f32.mrf.mxu0
    %v273 = vadd.f32 %v98, %v272
    %274 = vdwg.mxu0
    %275 = vmatprep.subr.mxu0 0.0
    %276 = vmatpush1.msra.mxu0 0.0
    %277 = vmatprep.subr.mxu0 0.0
    %278 = vmatpush1.msra.mxu0 0.0
    %279 = vmatprep.subr.mxu0 0.0
    %280 = vmatpush1.msra.mxu0 0.0
    %281 = vmatprep.subr.mxu0 0.0
    %282 = vmatpush1.msra.mxu0 0.0
    %283 = vmatprep.subr.mxu0 0.0
    %284 = vmatpush1.msra.mxu0 0.0
    %285 = vmatprep.subr.mxu0 0.0
    %286 = vmatpush1.msra.mxu0 0.0
    %287 = vmatprep.subr.mxu0 0.0
    %288 = vmatpush1.msra.mxu0 0.0
    %289 = vmatprep.subr.mxu0 0.0
    %290 = vmatpush1.msra.mxu0 0.0
    %291 = vmatprep.subr.mxu0 0.0
    %292 = vmatpush1.msra.mxu0 0.0
    %293 = vmatprep.subr.mxu0 0.0
    %294 = vmatpush1.msra.mxu0 0.0
    %295 = vmatprep.subr.mxu0 0.0
    %296 = vmatpush1.msra.mxu0 0.0
    %297 = vmatprep.subr.mxu0 0.0
    %298 = vmatpush1.msra.mxu0 0.0
    %299 = vmatprep.subr.mxu0 0.0
    %300 = vmatpush1.msra.mxu0 0.0
    %301 = vmatprep.subr.mxu0 0.0
    %302 = vmatpush1.msra.mxu0 0.0
    %303 = vmatprep.subr.mxu0 0.0
    %304 = vmatpush1.msra.mxu0 0.0
    %305 = vmatprep.subr.mxu0 %v186
    %306 = vmatpush1.msra.mxu0 %v184
    %307 = vmatprep.subr.mxu0 0.0
    %308 = vmatpush2.msra.mxu0 0.0
    %309 = vmatprep.subr.mxu0 0.0
    %310 = vmatpush2.msra.mxu0 0.0
    %311 = vmatprep.subr.mxu0 0.0
    %312 = vmatpush2.msra.mxu0 0.0
    %313 = vmatprep.subr.mxu0 0.0
    %314 = vmatpush2.msra.mxu0 0.0
    %315 = vmatprep.subr.mxu0 0.0
    %316 = vmatpush2.msra.mxu0 0.0
    %317 = vmatprep.subr.mxu0 0.0
    %318 = vmatpush2.msra.mxu0 0.0
    %319 = vmatprep.subr.mxu0 0.0
    %320 = vmatpush2.msra.mxu0 0.0
    %321 = vmatprep.subr.mxu0 0.0
    %322 = vmatpush2.msra.mxu0 0.0
    %323 = vmatprep.subr.mxu0 0.0
    %324 = vmatpush2.msra.mxu0 0.0
    %325 = vmatprep.subr.mxu0 0.0
    %326 = vmatpush2.msra.mxu0 0.0
    %327 = vmatprep.subr.mxu0 0.0
    %328 = vmatpush2.msra.mxu0 0.0
    %329 = vmatprep.subr.mxu0 0.0
    %330 = vmatpush2.msra.mxu0 0.0
    %331 = vmatprep.subr.mxu0 0.0
    %332 = vmatpush2.msra.mxu0 0.0
    %333 = vmatprep.subr.mxu0 0.0
    %334 = vmatpush2.msra.mxu0 0.0
    %335 = vmatprep.subr.mxu0 0.0
    %336 = vmatpush2.msra.mxu0 0.0
    %337 = vmatprep.subr.mxu0 0.0
    %338 = vmatpush2.msra.mxu0 0.0
    %339 = vmatprep.mubr.f32.mxu0 0.0
    %340 = vmatmul.mubr.f32.gmra.mxu0 %v178
    %v341 = vpop.f32.mrf.mxu0
    %v342 = vadd.f32 %v102, %v341
    %v343 = vpop.f32.mrf.mxu0
    %v344 = vadd.f32 %v106, %v343
    %345 = vdwg.mxu0
    %346 = vmatprep.subr.mxu0 0.0
    %347 = vmatpush1.msra.mxu0 0.0
    %348 = vmatprep.subr.mxu0 0.0
    %349 = vmatpush1.msra.mxu0 0.0
    %350 = vmatprep.subr.mxu0 0.0
    %351 = vmatpush1.msra.mxu0 0.0
    %352 = vmatprep.subr.mxu0 0.0
    %353 = vmatpush1.msra.mxu0 0.0
    %354 = vmatprep.subr.mxu0 0.0
    %355 = vmatpush1.msra.mxu0 0.0
    %356 = vmatprep.subr.mxu0 0.0
    %357 = vmatpush1.msra.mxu0 0.0
    %358 = vmatprep.subr.mxu0 0.0
    %359 = vmatpush1.msra.mxu0 0.0
    %360 = vmatprep.subr.mxu0 0.0
    %361 = vmatpush1.msra.mxu0 0.0
    %362 = vmatprep.subr.mxu0 0.0
    %363 = vmatpush1.msra.mxu0 0.0
    %364 = vmatprep.subr.mxu0 0.0
    %365 = vmatpush1.msra.mxu0 0.0
    %366 = vmatprep.subr.mxu0 0.0
    %367 = vmatpush1.msra.mxu0 0.0
    %368 = vmatprep.subr.mxu0 0.0
    %369 = vmatpush1.msra.mxu0 0.0
    %370 = vmatprep.subr.mxu0 0.0
    %371 = vmatpush1.msra.mxu0 0.0
    %372 = vmatprep.subr.mxu0 0.0
    %373 = vmatpush1.msra.mxu0 0.0
    %374 = vmatprep.subr.mxu0 0.0
    %375 = vmatpush1.msra.mxu0 0.0
    %376 = vmatprep.subr.mxu0 %v190
    %377 = vmatpush1.msra.mxu0 %v188
    %378 = vmatprep.subr.mxu0 0.0
    %379 = vmatpush2.msra.mxu0 0.0
    %380 = vmatprep.subr.mxu0 0.0
    %381 = vmatpush2.msra.mxu0 0.0
    %382 = vmatprep.subr.mxu0 0.0
    %383 = vmatpush2.msra.mxu0 0.0
    %384 = vmatprep.subr.mxu0 0.0
    %385 = vmatpush2.msra.mxu0 0.0
    %386 = vmatprep.subr.mxu0 0.0
    %387 = vmatpush2.msra.mxu0 0.0
    %388 = vmatprep.subr.mxu0 0.0
    %389 = vmatpush2.msra.mxu0 0.0
    %390 = vmatprep.subr.mxu0 0.0
    %391 = vmatpush2.msra.mxu0 0.0
    %392 = vmatprep.subr.mxu0 0.0
    %393 = vmatpush2.msra.mxu0 0.0
    %394 = vmatprep.subr.mxu0 0.0
    %395 = vmatpush2.msra.mxu0 0.0
    %396 = vmatprep.subr.mxu0 0.0
    %397 = vmatpush2.msra.mxu0 0.0
    %398 = vmatprep.subr.mxu0 0.0
    %399 = vmatpush2.msra.mxu0 0.0
    %400 = vmatprep.subr.mxu0 0.0
    %401 = vmatpush2.msra.mxu0 0.0
    %402 = vmatprep.subr.mxu0 0.0
    %403 = vmatpush2.msra.mxu0 0.0
    %404 = vmatprep.subr.mxu0 0.0
    %405 = vmatpush2.msra.mxu0 0.0
    %406 = vmatprep.subr.mxu0 0.0
    %407 = vmatpush2.msra.mxu0 0.0
    %408 = vmatprep.subr.mxu0 0.0
    %409 = vmatpush2.msra.mxu0 0.0
    %410 = vmatprep.mubr.f32.mxu0 0.0
    %411 = vmatmul.mubr.f32.gmra.mxu0 %v178
    %v412 = vpop.f32.mrf.mxu0
    %v413 = vadd.f32 %v110, %v412
    %v414 = vpop.f32.mrf.mxu0
    %v415 = vadd.f32 %v114, %v414
    %416 = vdwg.mxu0
    %417 = vmatprep.subr.mxu0 0.0
    %418 = vmatpush1.msra.mxu0 0.0
    %419 = vmatprep.subr.mxu0 0.0
    %420 = vmatpush1.msra.mxu0 0.0
    %421 = vmatprep.subr.mxu0 0.0
    %422 = vmatpush1.msra.mxu0 0.0
    %423 = vmatprep.subr.mxu0 0.0
    %424 = vmatpush1.msra.mxu0 0.0
    %425 = vmatprep.subr.mxu0 0.0
    %426 = vmatpush1.msra.mxu0 0.0
    %427 = vmatprep.subr.mxu0 0.0
    %428 = vmatpush1.msra.mxu0 0.0
    %429 = vmatprep.subr.mxu0 0.0
    %430 = vmatpush1.msra.mxu0 0.0
    %431 = vmatprep.subr.mxu0 0.0
    %432 = vmatpush1.msra.mxu0 0.0
    %433 = vmatprep.subr.mxu0 0.0
    %434 = vmatpush1.msra.mxu0 0.0
    %435 = vmatprep.subr.mxu0 0.0
    %436 = vmatpush1.msra.mxu0 0.0
    %437 = vmatprep.subr.mxu0 0.0
    %438 = vmatpush1.msra.mxu0 0.0
    %439 = vmatprep.subr.mxu0 0.0
    %440 = vmatpush1.msra.mxu0 0.0
    %441 = vmatprep.subr.mxu0 0.0
    %442 = vmatpush1.msra.mxu0 0.0
    %443 = vmatprep.subr.mxu0 0.0
    %444 = vmatpush1.msra.mxu0 0.0
    %445 = vmatprep.subr.mxu0 0.0
    %446 = vmatpush1.msra.mxu0 0.0
    %447 = vmatprep.subr.mxu0 %v194
    %448 = vmatpush1.msra.mxu0 %v192
    %449 = vmatprep.subr.mxu0 0.0
    %450 = vmatpush2.msra.mxu0 0.0
    %451 = vmatprep.subr.mxu0 0.0
    %452 = vmatpush2.msra.mxu0 0.0
    %453 = vmatprep.subr.mxu0 0.0
    %454 = vmatpush2.msra.mxu0 0.0
    %455 = vmatprep.subr.mxu0 0.0
    %456 = vmatpush2.msra.mxu0 0.0
    %457 = vmatprep.subr.mxu0 0.0
    %458 = vmatpush2.msra.mxu0 0.0
    %459 = vmatprep.subr.mxu0 0.0
    %460 = vmatpush2.msra.mxu0 0.0
    %461 = vmatprep.subr.mxu0 0.0
    %462 = vmatpush2.msra.mxu0 0.0
    %463 = vmatprep.subr.mxu0 0.0
    %464 = vmatpush2.msra.mxu0 0.0
    %465 = vmatprep.subr.mxu0 0.0
    %466 = vmatpush2.msra.mxu0 0.0
    %467 = vmatprep.subr.mxu0 0.0
    %468 = vmatpush2.msra.mxu0 0.0
    %469 = vmatprep.subr.mxu0 0.0
    %470 = vmatpush2.msra.mxu0 0.0
    %471 = vmatprep.subr.mxu0 0.0
    %472 = vmatpush2.msra.mxu0 0.0
    %473 = vmatprep.subr.mxu0 0.0
    %474 = vmatpush2.msra.mxu0 0.0
    %475 = vmatprep.subr.mxu0 0.0
    %476 = vmatpush2.msra.mxu0 0.0
    %477 = vmatprep.subr.mxu0 0.0
    %478 = vmatpush2.msra.mxu0 0.0
    %479 = vmatprep.subr.mxu0 0.0
    %480 = vmatpush2.msra.mxu0 0.0
    %481 = vmatprep.mubr.f32.mxu0 0.0
    %482 = vmatmul.mubr.f32.gmra.mxu0 %v178
    %v483 = vpop.f32.mrf.mxu0
    %v484 = vadd.f32 %v118, %v483
    %v485 = vpop.f32.mrf.mxu0
    %v486 = vadd.f32 %v122, %v485
    %487 = vdwg.mxu0
    %488 = vmatprep.subr.mxu0 0.0
    %489 = vmatpush1.msra.mxu0 0.0
    %490 = vmatprep.subr.mxu0 0.0
    %491 = vmatpush1.msra.mxu0 0.0
    %492 = vmatprep.subr.mxu0 0.0
    %493 = vmatpush1.msra.mxu0 0.0
    %494 = vmatprep.subr.mxu0 0.0
    %495 = vmatpush1.msra.mxu0 0.0
    %496 = vmatprep.subr.mxu0 0.0
    %497 = vmatpush1.msra.mxu0 0.0
    %498 = vmatprep.subr.mxu0 0.0
    %499 = vmatpush1.msra.mxu0 0.0
    %500 = vmatprep.subr.mxu0 0.0
    %501 = vmatpush1.msra.mxu0 0.0
    %502 = vmatprep.subr.mxu0 0.0
    %503 = vmatpush1.msra.mxu0 0.0
    %504 = vmatprep.subr.mxu0 0.0
    %505 = vmatpush1.msra.mxu0 0.0
    %506 = vmatprep.subr.mxu0 0.0
    %507 = vmatpush1.msra.mxu0 0.0
    %508 = vmatprep.subr.mxu0 0.0
    %509 = vmatpush1.msra.mxu0 0.0
    %510 = vmatprep.subr.mxu0 0.0
    %511 = vmatpush1.msra.mxu0 0.0
    %512 = vmatprep.subr.mxu0 0.0
    %513 = vmatpush1.msra.mxu0 0.0
    %514 = vmatprep.subr.mxu0 0.0
    %515 = vmatpush1.msra.mxu0 0.0
    %516 = vmatprep.subr.mxu0 0.0
    %517 = vmatpush1.msra.mxu0 0.0
    %518 = vmatprep.subr.mxu0 %v198
    %519 = vmatpush1.msra.mxu0 %v196
    %520 = vmatprep.subr.mxu0 0.0
    %521 = vmatpush2.msra.mxu0 0.0
    %522 = vmatprep.subr.mxu0 0.0
    %523 = vmatpush2.msra.mxu0 0.0
    %524 = vmatprep.subr.mxu0 0.0
    %525 = vmatpush2.msra.mxu0 0.0
    %526 = vmatprep.subr.mxu0 0.0
    %527 = vmatpush2.msra.mxu0 0.0
    %528 = vmatprep.subr.mxu0 0.0
    %529 = vmatpush2.msra.mxu0 0.0
    %530 = vmatprep.subr.mxu0 0.0
    %531 = vmatpush2.msra.mxu0 0.0
    %532 = vmatprep.subr.mxu0 0.0
    %533 = vmatpush2.msra.mxu0 0.0
    %534 = vmatprep.subr.mxu0 0.0
    %535 = vmatpush2.msra.mxu0 0.0
    %536 = vmatprep.subr.mxu0 0.0
    %537 = vmatpush2.msra.mxu0 0.0
    %538 = vmatprep.subr.mxu0 0.0
    %539 = vmatpush2.msra.mxu0 0.0
    %540 = vmatprep.subr.mxu0 0.0
    %541 = vmatpush2.msra.mxu0 0.0
    %542 = vmatprep.subr.mxu0 0.0
    %543 = vmatpush2.msra.mxu0 0.0
    %544 = vmatprep.subr.mxu0 0.0
    %545 = vmatpush2.msra.mxu0 0.0
    %546 = vmatprep.subr.mxu0 0.0
    %547 = vmatpush2.msra.mxu0 0.0
    %548 = vmatprep.subr.mxu0 0.0
    %549 = vmatpush2.msra.mxu0 0.0
    %550 = vmatprep.subr.mxu0 0.0
    %551 = vmatpush2.msra.mxu0 0.0
    %552 = vmatprep.mubr.f32.mxu0 0.0
    %553 = vmatmul.mubr.f32.gmra.mxu0 %v178
    %v554 = vpop.f32.mrf.mxu0
    %v555 = vadd.f32 %v126, %v554
    %v556 = vpop.f32.mrf.mxu0
    %v557 = vadd.f32 %v130, %v556
    %558 = vdwg.mxu0
    %559 = vmatprep.subr.mxu0 0.0
    %560 = vmatpush1.msra.mxu0 0.0
    %561 = vmatprep.subr.mxu0 0.0
    %562 = vmatpush1.msra.mxu0 0.0
    %563 = vmatprep.subr.mxu0 0.0
    %564 = vmatpush1.msra.mxu0 0.0
    %565 = vmatprep.subr.mxu0 0.0
    %566 = vmatpush1.msra.mxu0 0.0
    %567 = vmatprep.subr.mxu0 0.0
    %568 = vmatpush1.msra.mxu0 0.0
    %569 = vmatprep.subr.mxu0 0.0
    %570 = vmatpush1.msra.mxu0 0.0
    %571 = vmatprep.subr.mxu0 0.0
    %572 = vmatpush1.msra.mxu0 0.0
    %573 = vmatprep.subr.mxu0 0.0
    %574 = vmatpush1.msra.mxu0 0.0
    %575 = vmatprep.subr.mxu0 0.0
    %576 = vmatpush1.msra.mxu0 0.0
    %577 = vmatprep.subr.mxu0 0.0
    %578 = vmatpush1.msra.mxu0 0.0
    %579 = vmatprep.subr.mxu0 0.0
    %580 = vmatpush1.msra.mxu0 0.0
    %581 = vmatprep.subr.mxu0 0.0
    %582 = vmatpush1.msra.mxu0 0.0
    %583 = vmatprep.subr.mxu0 0.0
    %584 = vmatpush1.msra.mxu0 0.0
    %585 = vmatprep.subr.mxu0 0.0
    %586 = vmatpush1.msra.mxu0 0.0
    %587 = vmatprep.subr.mxu0 0.0
    %588 = vmatpush1.msra.mxu0 0.0
    %589 = vmatprep.subr.mxu0 %v202
    %590 = vmatpush1.msra.mxu0 %v200
    %591 = vmatprep.subr.mxu0 0.0
    %592 = vmatpush2.msra.mxu0 0.0
    %593 = vmatprep.subr.mxu0 0.0
    %594 = vmatpush2.msra.mxu0 0.0
    %595 = vmatprep.subr.mxu0 0.0
    %596 = vmatpush2.msra.mxu0 0.0
    %597 = vmatprep.subr.mxu0 0.0
    %598 = vmatpush2.msra.mxu0 0.0
    %599 = vmatprep.subr.mxu0 0.0
    %600 = vmatpush2.msra.mxu0 0.0
    %601 = vmatprep.subr.mxu0 0.0
    %602 = vmatpush2.msra.mxu0 0.0
    %603 = vmatprep.subr.mxu0 0.0
    %604 = vmatpush2.msra.mxu0 0.0
    %605 = vmatprep.subr.mxu0 0.0
    %606 = vmatpush2.msra.mxu0 0.0
    %607 = vmatprep.subr.mxu0 0.0
    %608 = vmatpush2.msra.mxu0 0.0
    %609 = vmatprep.subr.mxu0 0.0
    %610 = vmatpush2.msra.mxu0 0.0
    %611 = vmatprep.subr.mxu0 0.0
    %612 = vmatpush2.msra.mxu0 0.0
    %613 = vmatprep.subr.mxu0 0.0
    %614 = vmatpush2.msra.mxu0 0.0
    %615 = vmatprep.subr.mxu0 0.0
    %616 = vmatpush2.msra.mxu0 0.0
    %617 = vmatprep.subr.mxu0 0.0
    %618 = vmatpush2.msra.mxu0 0.0
    %619 = vmatprep.subr.mxu0 0.0
    %620 = vmatpush2.msra.mxu0 0.0
    %621 = vmatprep.subr.mxu0 0.0
    %622 = vmatpush2.msra.mxu0 0.0
    %623 = vmatprep.mubr.f32.mxu0 0.0
    %624 = vmatmul.mubr.f32.gmra.mxu0 %v178
    %v625 = vpop.f32.mrf.mxu0
    %v626 = vadd.f32 %v134, %v625
    %v627 = vpop.f32.mrf.mxu0
    %v628 = vadd.f32 %v138, %v627
    %629 = vdwg.mxu0
    %v630 = vld [vmem:[%s5] sm:$0xf]
    %v631 = vld [vmem:[%s5 + $0x4] sm:$0xf]
    %v632 = vld [vmem:[%s4] sm:$0x77]
    %v633 = vld [vmem:[%s4 + $0x8] sm:$0x77]
    %v634 = vld [vmem:[%s4 + $0x10] sm:$0x77]
    %v635 = vld [vmem:[%s4 + $0x18] sm:$0x77]
    %v640 = vcombine.low %v271, %v273
    %v641 = vcombine.low %v342, %v344
    %v643 = vunpack.c.l.s4 1966171168
    %v644 = vunpack.c.0.s8 %v643
    %v645 = vlaneseq
    %v646 = vshrl.u32 %v645, 7
    %v647 = vsub.s32 %v644, %v646
    %v648 = vrot.slane %v640, %v647
    %v650 = vunpack.c.l.s4 1966171168
    %v651 = vunpack.c.0.s8 %v650
    %v652 = vlaneseq
    %v653 = vshrl.u32 %v652, 7
    %v654 = vsub.s32 %v651, %v653
    %v655 = vrot.slane %v641, %v654
    %v656 = vcombine.low %v648, %v655
    %v657 = vcombine.high %v648, %v655
    %v659 = vunpack.c.l.s4 1966171168
    %v660 = vunpack.c.0.s8 %v659
    %v661 = vlaneseq
    %v662 = vshrl.u32 %v661, 7
    %v663 = vsub.s32 %v660, %v662
    %v664 = vrot.slane %v656, %v663
    %v666 = vunpack.c.l.s4 1966171168
    %v667 = vunpack.c.0.s8 %v666
    %v668 = vlaneseq
    %v669 = vshrl.u32 %v668, 7
    %v670 = vsub.s32 %v667, %v669
    %v671 = vrot.slane %v657, %v670
    %v674 = vlaneseq
    %vm675 = vcmp.ge.s32.totalorder %v674, 0
    %vm676 = vcmp.lt.s32.totalorder %v674, 512
    %vm677 = vmand %vm675, %vm676
    %678 = vst.msk [vmem:[%s8] ss:$4 sm:$0xf] %vm677, %v664
    %s679 = scalar_lea.vmem %s8, 16
    %680 = vst.msk [vmem:[%s679] ss:$4 sm:$0xf] %vm677, %v671
    %681 = vst [vmem:[#allocation2] sm:$0x3] %v271
    %682 = vst [vmem:[#allocation2 + $0x8] sm:$0x3] %v273
    %683 = vst [vmem:[#allocation2 + $0x10] sm:$0x3] %v342
    %684 = vst [vmem:[#allocation2 + $0x18] sm:$0x3] %v344
    %686 = vset.pattern.permute.xlu0 0
    %687 = vperm.xlu0 %686, %v630
    %v688 = vpop.permute.xlu0 %687
    %691 = vset.pattern.permute.xlu0 0
    %692 = vperm.xlu0 %691, %v631
    %v693 = vpop.permute.xlu0 %692
    %v699 = vlaneseq
    %v700 = vshrl.u32 %v699, 7
    %v701 = vsub.s32 0, %v700
    %v702 = vrot.slane %v632, %v701
    %v703 = vlaneseq
    %v704 = vshrl.u32 %v703, 7
    %v705 = vsub.s32 4, %v704
    %v706 = vrot.slane %v632, %v705
    %v707 = vlaneseq
    %v708 = vshrl.u32 %v707, 7
    %v709 = vsub.s32 0, %v708
    %v710 = vrot.slane %v633, %v709
    %v711 = vlaneseq
    %v712 = vshrl.u32 %v711, 7
    %v713 = vsub.s32 4, %v712
    %v714 = vrot.slane %v633, %v713
    %v715 = vlaneseq
    %v716 = vshrl.u32 %v715, 7
    %v717 = vsub.s32 0, %v716
    %v718 = vrot.slane %v634, %v717
    %v719 = vlaneseq
    %v720 = vshrl.u32 %v719, 7
    %v721 = vsub.s32 4, %v720
    %v722 = vrot.slane %v634, %v721
    %v723 = vlaneseq
    %v724 = vshrl.u32 %v723, 7
    %v725 = vsub.s32 0, %v724
    %v726 = vrot.slane %v635, %v725
    %v727 = vlaneseq
    %v728 = vshrl.u32 %v727, 7
    %v729 = vsub.s32 4, %v728
    %v730 = vrot.slane %v635, %v729
    %v739 = vmul.f32 %v688, %v702
    %v740 = vmul.f32 %v688, %v706
    %v741 = vmul.f32 %v688, %v710
    %v742 = vmul.f32 %v688, %v714
    %v743 = vmul.f32 %v693, %v718
    %v744 = vmul.f32 %v693, %v722
    %v745 = vmul.f32 %v693, %v726
    %v746 = vmul.f32 %v693, %v730
    %747 = vset.pattern.permute.xlu0 1
    %748 = vperm.xlu0 %747, %v630
    %v749 = vpop.permute.xlu0 %748
    %751 = vset.pattern.permute.xlu0 1
    %752 = vperm.xlu0 %751, %v631
    %v753 = vpop.permute.xlu0 %752
    %v755 = vlaneseq
    %v756 = vshrl.u32 %v755, 7
    %v757 = vsub.s32 1, %v756
    %v758 = vrot.slane %v632, %v757
    %v759 = vlaneseq
    %v760 = vshrl.u32 %v759, 7
    %v761 = vsub.s32 5, %v760
    %v762 = vrot.slane %v632, %v761
    %v763 = vlaneseq
    %v764 = vshrl.u32 %v763, 7
    %v765 = vsub.s32 1, %v764
    %v766 = vrot.slane %v633, %v765
    %v767 = vlaneseq
    %v768 = vshrl.u32 %v767, 7
    %v769 = vsub.s32 5, %v768
    %v770 = vrot.slane %v633, %v769
    %v771 = vlaneseq
    %v772 = vshrl.u32 %v771, 7
    %v773 = vsub.s32 1, %v772
    %v774 = vrot.slane %v634, %v773
    %v775 = vlaneseq
    %v776 = vshrl.u32 %v775, 7
    %v777 = vsub.s32 5, %v776
    %v778 = vrot.slane %v634, %v777
    %v779 = vlaneseq
    %v780 = vshrl.u32 %v779, 7
    %v781 = vsub.s32 1, %v780
    %v782 = vrot.slane %v635, %v781
    %v783 = vlaneseq
    %v784 = vshrl.u32 %v783, 7
    %v785 = vsub.s32 5, %v784
    %v786 = vrot.slane %v635, %v785
    %v795 = vmul.f32 %v749, %v758
    %v796 = vmul.f32 %v749, %v762
    %v797 = vmul.f32 %v749, %v766
    %v798 = vmul.f32 %v749, %v770
    %v799 = vmul.f32 %v753, %v774
    %v800 = vmul.f32 %v753, %v778
    %v801 = vmul.f32 %v753, %v782
    %v802 = vmul.f32 %v753, %v786
    %v803 = vadd.f32 %v739, %v795
    %v804 = vadd.f32 %v740, %v796
    %v805 = vadd.f32 %v741, %v797
    %v806 = vadd.f32 %v742, %v798
    %v807 = vadd.f32 %v743, %v799
    %v808 = vadd.f32 %v744, %v800
    %v809 = vadd.f32 %v745, %v801
    %v810 = vadd.f32 %v746, %v802
    %811 = vset.pattern.permute.xlu0 2
    %812 = vperm.xlu0 %811, %v630
    %v813 = vpop.permute.xlu0 %812
    %815 = vset.pattern.permute.xlu0 2
    %816 = vperm.xlu0 %815, %v631
    %v817 = vpop.permute.xlu0 %816
    %v819 = vlaneseq
    %v820 = vshrl.u32 %v819, 7
    %v821 = vsub.s32 2, %v820
    %v822 = vrot.slane %v632, %v821
    %v823 = vlaneseq
    %v824 = vshrl.u32 %v823, 7
    %v825 = vsub.s32 6, %v824
    %v826 = vrot.slane %v632, %v825
    %v827 = vlaneseq
    %v828 = vshrl.u32 %v827, 7
    %v829 = vsub.s32 2, %v828
    %v830 = vrot.slane %v633, %v829
    %v831 = vlaneseq
    %v832 = vshrl.u32 %v831, 7
    %v833 = vsub.s32 6, %v832
    %v834 = vrot.slane %v633, %v833
    %v835 = vlaneseq
    %v836 = vshrl.u32 %v835, 7
    %v837 = vsub.s32 2, %v836
    %v838 = vrot.slane %v634, %v837
    %v839 = vlaneseq
    %v840 = vshrl.u32 %v839, 7
    %v841 = vsub.s32 6, %v840
    %v842 = vrot.slane %v634, %v841
    %v843 = vlaneseq
    %v844 = vshrl.u32 %v843, 7
    %v845 = vsub.s32 2, %v844
    %v846 = vrot.slane %v635, %v845
    %v847 = vlaneseq
    %v848 = vshrl.u32 %v847, 7
    %v849 = vsub.s32 6, %v848
    %v850 = vrot.slane %v635, %v849
    %v859 = vmul.f32 %v813, %v822
    %v860 = vmul.f32 %v813, %v826
    %v861 = vmul.f32 %v813, %v830
    %v862 = vmul.f32 %v813, %v834
    %v863 = vmul.f32 %v817, %v838
    %v864 = vmul.f32 %v817, %v842
    %v865 = vmul.f32 %v817, %v846
    %v866 = vmul.f32 %v817, %v850
    %v867 = vadd.f32 %v803, %v859
    %v868 = vadd.f32 %v804, %v860
    %v869 = vadd.f32 %v805, %v861
    %v870 = vadd.f32 %v806, %v862
    %v871 = vadd.f32 %v807, %v863
    %v872 = vadd.f32 %v808, %v864
    %v873 = vadd.f32 %v809, %v865
    %v874 = vadd.f32 %v810, %v866
    %875 = vset.pattern.permute.xlu0 3
    %876 = vperm.xlu0 %875, %v630
    %v877 = vpop.permute.xlu0 %876
    %879 = vset.pattern.permute.xlu0 3
    %880 = vperm.xlu0 %879, %v631
    %v881 = vpop.permute.xlu0 %880
    %v883 = vadd.f32 %v867, %v877
    %v884 = vadd.f32 %v868, %v877
    %v885 = vadd.f32 %v869, %v877
    %v886 = vadd.f32 %v870, %v877
    %v887 = vadd.f32 %v871, %v881
    %v888 = vadd.f32 %v872, %v881
    %v889 = vadd.f32 %v873, %v881
    %v890 = vadd.f32 %v874, %v881
    %v899 = vcombine.low %v883, %v884
    %v900 = vcombine.low %v885, %v886
    %v902 = vunpack.c.l.s4 1966171168
    %v903 = vunpack.c.0.s8 %v902
    %v904 = vlaneseq
    %v905 = vshrl.u32 %v904, 7
    %v906 = vsub.s32 %v903, %v905
    %v907 = vrot.slane %v899, %v906
    %v909 = vunpack.c.l.s4 1966171168
    %v910 = vunpack.c.0.s8 %v909
    %v911 = vlaneseq
    %v912 = vshrl.u32 %v911, 7
    %v913 = vsub.s32 %v910, %v912
    %v914 = vrot.slane %v900, %v913
    %v915 = vcombine.low %v907, %v914
    %v917 = vunpack.c.l.s4 1966171168
    %v918 = vunpack.c.0.s8 %v917
    %v919 = vlaneseq
    %v920 = vshrl.u32 %v919, 7
    %v921 = vsub.s32 %v918, %v920
    %v922 = vrot.slane %v915, %v921
    %v923 = vcombine.low %v887, %v888
    %v924 = vcombine.low %v889, %v890
    %v926 = vunpack.c.l.s4 1966171168
    %v927 = vunpack.c.0.s8 %v926
    %v928 = vlaneseq
    %v929 = vshrl.u32 %v928, 7
    %v930 = vsub.s32 %v927, %v929
    %v931 = vrot.slane %v923, %v930
    %v933 = vunpack.c.l.s4 1966171168
    %v934 = vunpack.c.0.s8 %v933
    %v935 = vlaneseq
    %v936 = vshrl.u32 %v935, 7
    %v937 = vsub.s32 %v934, %v936
    %v938 = vrot.slane %v924, %v937
    %v939 = vcombine.low %v931, %v938
    %v941 = vunpack.c.l.s4 1966171168
    %v942 = vunpack.c.0.s8 %v941
    %v943 = vlaneseq
    %v944 = vshrl.u32 %v943, 7
    %v945 = vsub.s32 %v942, %v944
    %v946 = vrot.slane %v939, %v945
    %949 = vst.msk [vmem:[%s9] ss:$4 sm:$0xf] %vm677, %v922
    %s950 = scalar_lea.vmem %s9, 16
    %951 = vst.msk [vmem:[%s950] ss:$4 sm:$0xf] %vm677, %v946
    %v952 = vrot.slane %v883, 2
    %v953 = vrot.slane %v887, 1
    %vm954 = vcmask 1047559
    %v955 = vsel %vm954, %v953, %v952
    %v956 = vrot.slane %v884, 2
    %v957 = vrot.slane %v888, 1
    %v958 = vsel %vm954, %v957, %v956
    %v959 = vrot.slane %v885, 2
    %v960 = vrot.slane %v889, 1
    %v961 = vsel %vm954, %v960, %v959
    %v962 = vrot.slane %v886, 2
    %v963 = vrot.slane %v890, 1
    %v964 = vsel %vm954, %v963, %v962
    %969 = vst [vmem:[#allocation2] sm:$0xc0] %v955
    %970 = vst [vmem:[#allocation2 + $0x8] sm:$0xc0] %v958
    %971 = vst [vmem:[#allocation2 + $0x10] sm:$0xc0] %v961
    %972 = vst [vmem:[#allocation2 + $0x18] sm:$0xc0] %v964
    %v977 = vcombine.low %v413, %v415
    %v978 = vcombine.low %v484, %v486
    %v980 = vunpack.c.l.s4 1966171168
    %v981 = vunpack.c.0.s8 %v980
    %v982 = vlaneseq
    %v983 = vshrl.u32 %v982, 7
    %v984 = vsub.s32 %v981, %v983
    %v985 = vrot.slane %v977, %v984
    %v987 = vunpack.c.l.s4 1966171168
    %v988 = vunpack.c.0.s8 %v987
    %v989 = vlaneseq
    %v990 = vshrl.u32 %v989, 7
    %v991 = vsub.s32 %v988, %v990
    %v992 = vrot.slane %v978, %v991
    %v993 = vcombine.low %v985, %v992
    %v994 = vcombine.high %v985, %v992
    %v996 = vunpack.c.l.s4 1966171168
    %v997 = vunpack.c.0.s8 %v996
    %v998 = vlaneseq
    %v999 = vshrl.u32 %v998, 7
    %v1000 = vsub.s32 %v997, %v999
    %v1001 = vrot.slane %v993, %v1000
    %v1003 = vunpack.c.l.s4 1966171168
    %v1004 = vunpack.c.0.s8 %v1003
    %v1005 = vlaneseq
    %v1006 = vshrl.u32 %v1005, 7
    %v1007 = vsub.s32 %v1004, %v1006
    %v1008 = vrot.slane %v994, %v1007
    %s1011 = scalar_lea.vmem %s8, 1
    %1012 = vst.msk [vmem:[%s1011] ss:$4 sm:$0xf] %vm677, %v1001
    %s1013 = scalar_lea.vmem %s8, 17
    %1014 = vst.msk [vmem:[%s1013] ss:$4 sm:$0xf] %vm677, %v1008
    %v1015 = vrot.slane %v413, 6
    %v1016 = vrot.slane %v415, 6
    %v1017 = vrot.slane %v484, 6
    %v1018 = vrot.slane %v486, 6
    %1023 = vst [vmem:[#allocation2] sm:$0xc] %v1015
    %1024 = vst [vmem:[#allocation2 + $0x8] sm:$0xc] %v1016
    %1025 = vst [vmem:[#allocation2 + $0x10] sm:$0xc] %v1017
    %1026 = vst [vmem:[#allocation2 + $0x18] sm:$0xc] %v1018
    %v1027 = vcombine.high %v907, %v914
    %v1029 = vunpack.c.l.s4 1966171168
    %v1030 = vunpack.c.0.s8 %v1029
    %v1031 = vlaneseq
    %v1032 = vshrl.u32 %v1031, 7
    %v1033 = vsub.s32 %v1030, %v1032
    %v1034 = vrot.slane %v1027, %v1033
    %v1035 = vcombine.high %v931, %v938
    %v1037 = vunpack.c.l.s4 1966171168
    %v1038 = vunpack.c.0.s8 %v1037
    %v1039 = vlaneseq
    %v1040 = vshrl.u32 %v1039, 7
    %v1041 = vsub.s32 %v1038, %v1040
    %v1042 = vrot.slane %v1035, %v1041
    %s1045 = scalar_lea.vmem %s9, 1
    %1046 = vst.msk [vmem:[%s1045] ss:$4 sm:$0xf] %vm677, %v1034
    %s1047 = scalar_lea.vmem %s9, 17
    %1048 = vst.msk [vmem:[%s1047] ss:$4 sm:$0xf] %vm677, %v1042
    %v1049 = vrot.slane %v883, 1
    %v1050 = vsel %vm163, %v887, %v1049
    %v1051 = vrot.slane %v884, 1
    %v1052 = vsel %vm163, %v888, %v1051
    %v1053 = vrot.slane %v885, 1
    %v1054 = vsel %vm163, %v889, %v1053
    %v1055 = vrot.slane %v886, 1
    %v1056 = vsel %vm163, %v890, %v1055
    %1061 = vst [vmem:[#allocation2 + $0x20] sm:$0x3] %v1050
    %1062 = vst [vmem:[#allocation2 + $0x28] sm:$0x3] %v1052
    %1063 = vst [vmem:[#allocation2 + $0x30] sm:$0x3] %v1054
    %1064 = vst [vmem:[#allocation2 + $0x38] sm:$0x3] %v1056
    %v1069 = vcombine.low %v555, %v557
    %v1070 = vcombine.low %v626, %v628
    %v1072 = vunpack.c.l.s4 1966171168
    %v1073 = vunpack.c.0.s8 %v1072
    %v1074 = vlaneseq
    %v1075 = vshrl.u32 %v1074, 7
    %v1076 = vsub.s32 %v1073, %v1075
    %v1077 = vrot.slane %v1069, %v1076
    %v1079 = vunpack.c.l.s4 1966171168
    %v1080 = vunpack.c.0.s8 %v1079
    %v1081 = vlaneseq
    %v1082 = vshrl.u32 %v1081, 7
    %v1083 = vsub.s32 %v1080, %v1082
    %v1084 = vrot.slane %v1070, %v1083
    %v1085 = vcombine.low %v1077, %v1084
    %v1086 = vcombine.high %v1077, %v1084
    %v1088 = vunpack.c.l.s4 1966171168
    %v1089 = vunpack.c.0.s8 %v1088
    %v1090 = vlaneseq
    %v1091 = vshrl.u32 %v1090, 7
    %v1092 = vsub.s32 %v1089, %v1091
    %v1093 = vrot.slane %v1085, %v1092
    %v1095 = vunpack.c.l.s4 1966171168
    %v1096 = vunpack.c.0.s8 %v1095
    %v1097 = vlaneseq
    %v1098 = vshrl.u32 %v1097, 7
    %v1099 = vsub.s32 %v1096, %v1098
    %v1100 = vrot.slane %v1086, %v1099
    %s1103 = scalar_lea.vmem %s8, 2
    %1104 = vst.msk [vmem:[%s1103] ss:$4 sm:$0xf] %vm677, %v1093
    %s1105 = scalar_lea.vmem %s8, 18
    %1106 = vst.msk [vmem:[%s1105] ss:$4 sm:$0xf] %vm677, %v1100
    %v1107 = vrot.slane %v555, 4
    %v1108 = vrot.slane %v557, 4
    %v1109 = vrot.slane %v626, 4
    %v1110 = vrot.slane %v628, 4
    %1115 = vst [vmem:[#allocation2] sm:$0x30] %v1107
    %1116 = vst [vmem:[#allocation2 + $0x8] sm:$0x30] %v1108
    %1117 = vst [vmem:[#allocation2 + $0x10] sm:$0x30] %v1109
    %1118 = vst [vmem:[#allocation2 + $0x18] sm:$0x30] %v1110
    %v1119 = vcombine.high %v922, %v922
    %v1120 = vcombine.high %v946, %v946
    %s1123 = scalar_lea.vmem %s9, 2
    %1124 = vst.msk [vmem:[%s1123] ss:$4 sm:$0xf] %vm677, %v1119
    %s1125 = scalar_lea.vmem %s9, 18
    %1126 = vst.msk [vmem:[%s1125] ss:$4 sm:$0xf] %vm677, %v1120
    %v1127 = vrot.slane %v887, 7
    %vm1128 = vcmask 1043459
    %v1129 = vsel %vm1128, %v1127, %v883
    %v1130 = vrot.slane %v888, 7
    %v1131 = vsel %vm1128, %v1130, %v884
    %v1132 = vrot.slane %v889, 7
    %v1133 = vsel %vm1128, %v1132, %v885
    %v1134 = vrot.slane %v890, 7
    %v1135 = vsel %vm1128, %v1134, %v886
    %1140 = vst [vmem:[#allocation2 + $0x20] sm:$0xc] %v1129
    %1141 = vst [vmem:[#allocation2 + $0x28] sm:$0xc] %v1131
    %1142 = vst [vmem:[#allocation2 + $0x30] sm:$0xc] %v1133
    %1143 = vst [vmem:[#allocation2 + $0x38] sm:$0xc] %v1135
    %v1144 = vld [vmem:[#allocation2] sm:$0xff]
    %v1145 = vld [vmem:[#allocation2 + $0x8] sm:$0xff]
    %v1146 = vld [vmem:[#allocation2 + $0x10] sm:$0xff]
    %v1147 = vld [vmem:[#allocation2 + $0x18] sm:$0xff]
    %v1148 = vld [vmem:[#allocation2 + $0x20] sm:$0xf]
    %v1149 = vld [vmem:[#allocation2 + $0x28] sm:$0xf]
    %v1150 = vld [vmem:[#allocation2 + $0x30] sm:$0xf]
    %v1151 = vld [vmem:[#allocation2 + $0x38] sm:$0xf]
    %v1152 = vld [vmem:[#allocation6] sm:$0xff]
    %v1153 = vld [vmem:[#allocation6 + $0x8] sm:$0xff]
    %v1154 = vld [vmem:[#allocation6 + $0x10] sm:$0xff]
    %v1155 = vld [vmem:[#allocation6 + $0x18] sm:$0xff]
    %v1156 = vld [vmem:[#allocation6 + $0x20] sm:$0xff]
    %v1157 = vld [vmem:[#allocation6 + $0x28] sm:$0xff]
    %v1158 = vld [vmem:[#allocation6 + $0x30] sm:$0xff]
    %v1159 = vld [vmem:[#allocation6 + $0x38] sm:$0xff]
    %v1160 = vld [vmem:[#allocation6 + $0x40] sm:$0xff]
    %v1161 = vld [vmem:[#allocation6 + $0x48] sm:$0xff]
    %v1162 = vld [vmem:[#allocation6 + $0x50] sm:$0xff]
    %v1163 = vld [vmem:[#allocation6 + $0x58] sm:$0xff]
    %v1164 = vld [vmem:[#allocation6 + $0x60] sm:$0xff]
    %v1165 = vld [vmem:[#allocation6 + $0x68] sm:$0xff]
    %v1166 = vld [vmem:[#allocation6 + $0x70] sm:$0xff]
    %v1167 = vld [vmem:[#allocation6 + $0x78] sm:$0xff]
    %v1168 = vld [vmem:[#allocation6 + $0x80] sm:$0xff]
    %v1169 = vld [vmem:[#allocation6 + $0x88] sm:$0xff]
    %v1170 = vld [vmem:[#allocation6 + $0x90] sm:$0xff]
    %v1171 = vld [vmem:[#allocation6 + $0x98] sm:$0xff]
    %v1172 = vld [vmem:[#allocation6 + $0xa0] sm:$0xff]
    %v1173 = vld [vmem:[#allocation6 + $0xa8] sm:$0xff]
    %v1174 = vld [vmem:[#allocation6 + $0xb0] sm:$0xff]
    %v1175 = vld [vmem:[#allocation6 + $0xb8] sm:$0xff]
    %v1176 = vld [vmem:[#allocation6 + $0xc0] sm:$0xff]
    %v1177 = vld [vmem:[#allocation6 + $0xc8] sm:$0xff]
    %v1178 = vld [vmem:[#allocation6 + $0xd0] sm:$0xff]
    %v1179 = vld [vmem:[#allocation6 + $0xd8] sm:$0xff]
    %v1180 = vld [vmem:[#allocation6 + $0xe0] sm:$0xff]
    %v1181 = vld [vmem:[#allocation6 + $0xe8] sm:$0xff]
    %v1182 = vld [vmem:[#allocation6 + $0xf0] sm:$0xff]
    %v1183 = vld [vmem:[#allocation6 + $0xf8] sm:$0xff]
    %v1184 = vld [vmem:[#allocation6 + $0x100] sm:$0xff]
    %v1185 = vld [vmem:[#allocation6 + $0x108] sm:$0xff]
    %v1186 = vld [vmem:[#allocation6 + $0x110] sm:$0xff]
    %v1187 = vld [vmem:[#allocation6 + $0x118] sm:$0xff]
    %v1188 = vld [vmem:[#allocation6 + $0x120] sm:$0xff]
    %v1189 = vld [vmem:[#allocation6 + $0x128] sm:$0xff]
    %v1190 = vld [vmem:[#allocation6 + $0x130] sm:$0xff]
    %v1191 = vld [vmem:[#allocation6 + $0x138] sm:$0xff]
    %v1192 = vld [vmem:[#allocation6 + $0x140] sm:$0xff]
    %v1193 = vld [vmem:[#allocation6 + $0x148] sm:$0xff]
    %v1194 = vld [vmem:[#allocation6 + $0x150] sm:$0xff]
    %v1195 = vld [vmem:[#allocation6 + $0x158] sm:$0xff]
    %v1196 = vld [vmem:[#allocation6 + $0x160] sm:$0xff]
    %v1197 = vld [vmem:[#allocation6 + $0x168] sm:$0xff]
    %v1198 = vld [vmem:[#allocation6 + $0x170] sm:$0xff]
    %v1199 = vld [vmem:[#allocation6 + $0x178] sm:$0xff]
    %v1200 = vld [vmem:[#allocation6 + $0x180] sm:$0xff]
    %v1201 = vld [vmem:[#allocation6 + $0x188] sm:$0xff]
    %v1202 = vld [vmem:[#allocation6 + $0x190] sm:$0xff]
    %v1203 = vld [vmem:[#allocation6 + $0x198] sm:$0xff]
    %v1204 = vld [vmem:[#allocation6 + $0x1a0] sm:$0xff]
    %v1205 = vld [vmem:[#allocation6 + $0x1a8] sm:$0xff]
    %v1206 = vld [vmem:[#allocation6 + $0x1b0] sm:$0xff]
    %v1207 = vld [vmem:[#allocation6 + $0x1b8] sm:$0xff]
    %v1208 = vld [vmem:[#allocation6 + $0x1c0] sm:$0xff]
    %v1209 = vld [vmem:[#allocation6 + $0x1c8] sm:$0xff]
    %v1210 = vld [vmem:[#allocation6 + $0x1d0] sm:$0xff]
    %v1211 = vld [vmem:[#allocation6 + $0x1d8] sm:$0xff]
    %v1212 = vld [vmem:[#allocation6 + $0x1e0] sm:$0xff]
    %v1213 = vld [vmem:[#allocation6 + $0x1e8] sm:$0xff]
    %v1214 = vld [vmem:[#allocation6 + $0x1f0] sm:$0xff]
    %v1215 = vld [vmem:[#allocation6 + $0x1f8] sm:$0xff]
    %1216 = vmatprep.subr.mxu0 0.0
    %1217 = vmatpush1.msra.mxu0 %v1167
    %1218 = vmatprep.subr.mxu0 0.0
    %1219 = vmatpush1.msra.mxu0 %v1166
    %1220 = vmatprep.subr.mxu0 0.0
    %1221 = vmatpush1.msra.mxu0 %v1165
    %1222 = vmatprep.subr.mxu0 0.0
    %1223 = vmatpush1.msra.mxu0 %v1164
    %1224 = vmatprep.subr.mxu0 0.0
    %1225 = vmatpush1.msra.mxu0 %v1163
    %1226 = vmatprep.subr.mxu0 0.0
    %1227 = vmatpush1.msra.mxu0 %v1162
    %1228 = vmatprep.subr.mxu0 0.0
    %1229 = vmatpush1.msra.mxu0 %v1161
    %1230 = vmatprep.subr.mxu0 0.0
    %1231 = vmatpush1.msra.mxu0 %v1160
    %1232 = vmatprep.subr.mxu0 0.0
    %1233 = vmatpush1.msra.mxu0 %v1159
    %1234 = vmatprep.subr.mxu0 0.0
    %1235 = vmatpush1.msra.mxu0 %v1158
    %1236 = vmatprep.subr.mxu0 0.0
    %1237 = vmatpush1.msra.mxu0 %v1157
    %1238 = vmatprep.subr.mxu0 0.0
    %1239 = vmatpush1.msra.mxu0 %v1156
    %1240 = vmatprep.subr.mxu0 0.0
    %1241 = vmatpush1.msra.mxu0 %v1155
    %1242 = vmatprep.subr.mxu0 0.0
    %1243 = vmatpush1.msra.mxu0 %v1154
    %1244 = vmatprep.subr.mxu0 0.0
    %1245 = vmatpush1.msra.mxu0 %v1153
    %1246 = vmatprep.subr.mxu0 0.0
    %1247 = vmatpush1.msra.mxu0 %v1152
    %1248 = vmatprep.subr.mxu0 0.0
    %1249 = vmatpush2.msra.mxu0 %v1183
    %1250 = vmatprep.subr.mxu0 0.0
    %1251 = vmatpush2.msra.mxu0 %v1182
    %1252 = vmatprep.subr.mxu0 0.0
    %1253 = vmatpush2.msra.mxu0 %v1181
    %1254 = vmatprep.subr.mxu0 0.0
    %1255 = vmatpush2.msra.mxu0 %v1180
    %1256 = vmatprep.subr.mxu0 0.0
    %1257 = vmatpush2.msra.mxu0 %v1179
    %1258 = vmatprep.subr.mxu0 0.0
    %1259 = vmatpush2.msra.mxu0 %v1178
    %1260 = vmatprep.subr.mxu0 0.0
    %1261 = vmatpush2.msra.mxu0 %v1177
    %1262 = vmatprep.subr.mxu0 0.0
    %1263 = vmatpush2.msra.mxu0 %v1176
    %1264 = vmatprep.subr.mxu0 0.0
    %1265 = vmatpush2.msra.mxu0 %v1175
    %1266 = vmatprep.subr.mxu0 0.0
    %1267 = vmatpush2.msra.mxu0 %v1174
    %1268 = vmatprep.subr.mxu0 0.0
    %1269 = vmatpush2.msra.mxu0 %v1173
    %1270 = vmatprep.subr.mxu0 0.0
    %1271 = vmatpush2.msra.mxu0 %v1172
    %1272 = vmatprep.subr.mxu0 0.0
    %1273 = vmatpush2.msra.mxu0 %v1171
    %1274 = vmatprep.subr.mxu0 0.0
    %1275 = vmatpush2.msra.mxu0 %v1170
    %1276 = vmatprep.subr.mxu0 0.0
    %1277 = vmatpush2.msra.mxu0 %v1169
    %1278 = vmatprep.subr.mxu0 0.0
    %1279 = vmatpush2.msra.mxu0 %v1168
    %1280 = vmatprep.mubr.f32.mxu0 %v1145
    %1281 = vmatmul.mubr.f32.gmra.mxu0 %v1144
    %v1282 = vpop.f32.mrf.mxu0
    %v1283 = vadd.f32 0.0, %v1282
    %v1284 = vpop.f32.mrf.mxu0
    %1285 = vmatprep.mubr.f32.mxu0 %v1149
    %1286 = vmatmul.mubr.f32.gmra.mxu0 %v1148
    %v1287 = vpop.f32.mrf.mxu0
    %v1288 = vadd.f32 0.0, %v1287
    %v1289 = vpop.f32.mrf.mxu0
    %1290 = vdwg.mxu0
    %1291 = vmatprep.subr.mxu0 0.0
    %1292 = vmatpush1.msra.mxu0 %v1199
    %1293 = vmatprep.subr.mxu0 0.0
    %1294 = vmatpush1.msra.mxu0 %v1198
    %1295 = vmatprep.subr.mxu0 0.0
    %1296 = vmatpush1.msra.mxu0 %v1197
    %1297 = vmatprep.subr.mxu0 0.0
    %1298 = vmatpush1.msra.mxu0 %v1196
    %1299 = vmatprep.subr.mxu0 0.0
    %1300 = vmatpush1.msra.mxu0 %v1195
    %1301 = vmatprep.subr.mxu0 0.0
    %1302 = vmatpush1.msra.mxu0 %v1194
    %1303 = vmatprep.subr.mxu0 0.0
    %1304 = vmatpush1.msra.mxu0 %v1193
    %1305 = vmatprep.subr.mxu0 0.0
    %1306 = vmatpush1.msra.mxu0 %v1192
    %1307 = vmatprep.subr.mxu0 0.0
    %1308 = vmatpush1.msra.mxu0 %v1191
    %1309 = vmatprep.subr.mxu0 0.0
    %1310 = vmatpush1.msra.mxu0 %v1190
    %1311 = vmatprep.subr.mxu0 0.0
    %1312 = vmatpush1.msra.mxu0 %v1189
    %1313 = vmatprep.subr.mxu0 0.0
    %1314 = vmatpush1.msra.mxu0 %v1188
    %1315 = vmatprep.subr.mxu0 0.0
    %1316 = vmatpush1.msra.mxu0 %v1187
    %1317 = vmatprep.subr.mxu0 0.0
    %1318 = vmatpush1.msra.mxu0 %v1186
    %1319 = vmatprep.subr.mxu0 0.0
    %1320 = vmatpush1.msra.mxu0 %v1185
    %1321 = vmatprep.subr.mxu0 0.0
    %1322 = vmatpush1.msra.mxu0 %v1184
    %1323 = vmatprep.subr.mxu0 0.0
    %1324 = vmatpush2.msra.mxu0 %v1215
    %1325 = vmatprep.subr.mxu0 0.0
    %1326 = vmatpush2.msra.mxu0 %v1214
    %1327 = vmatprep.subr.mxu0 0.0
    %1328 = vmatpush2.msra.mxu0 %v1213
    %1329 = vmatprep.subr.mxu0 0.0
    %1330 = vmatpush2.msra.mxu0 %v1212
    %1331 = vmatprep.subr.mxu0 0.0
    %1332 = vmatpush2.msra.mxu0 %v1211
    %1333 = vmatprep.subr.mxu0 0.0
    %1334 = vmatpush2.msra.mxu0 %v1210
    %1335 = vmatprep.subr.mxu0 0.0
    %1336 = vmatpush2.msra.mxu0 %v1209
    %1337 = vmatprep.subr.mxu0 0.0
    %1338 = vmatpush2.msra.mxu0 %v1208
    %1339 = vmatprep.subr.mxu0 0.0
    %1340 = vmatpush2.msra.mxu0 %v1207
    %1341 = vmatprep.subr.mxu0 0.0
    %1342 = vmatpush2.msra.mxu0 %v1206
    %1343 = vmatprep.subr.mxu0 0.0
    %1344 = vmatpush2.msra.mxu0 %v1205
    %1345 = vmatprep.subr.mxu0 0.0
    %1346 = vmatpush2.msra.mxu0 %v1204
    %1347 = vmatprep.subr.mxu0 0.0
    %1348 = vmatpush2.msra.mxu0 %v1203
    %1349 = vmatprep.subr.mxu0 0.0
    %1350 = vmatpush2.msra.mxu0 %v1202
    %1351 = vmatprep.subr.mxu0 0.0
    %1352 = vmatpush2.msra.mxu0 %v1201
    %1353 = vmatprep.subr.mxu0 0.0
    %1354 = vmatpush2.msra.mxu0 %v1200
    %1355 = vmatprep.mubr.f32.mxu0 %v1147
    %1356 = vmatmul.mubr.f32.gmra.mxu0 %v1146
    %v1357 = vpop.f32.mrf.mxu0
    %v1358 = vadd.f32 %v1283, %v1357
    %v1359 = vpop.f32.mrf.mxu0
    %1360 = vmatprep.mubr.f32.mxu0 %v1151
    %1361 = vmatmul.mubr.f32.gmra.mxu0 %v1150
    %v1362 = vpop.f32.mrf.mxu0
    %v1363 = vadd.f32 %v1288, %v1362
    %v1364 = vpop.f32.mrf.mxu0
    %1365 = vdwg.mxu0
    %1366 = vst [vmem:[#allocation8] sm:$0xff] %v1358
    %1367 = vst [vmem:[#allocation8 + $0x8] sm:$0xf] %v1363
    %v1369 = vrot.slane %v1358, 6
    %v1371 = vsub.f32 %v1358, %v1369
    %v1372 = vand.u32 2147483647, %v1371
    %v1374 = vrot.slane %v1363, 6
    %v1376 = vsub.f32 %v1358, %v1374
    %v1377 = vand.u32 2147483647, %v1376
    %v1379 = vrot.slane %v1377, 2
    %v1381 = vadd.f32 %v1372, %v1379
    %v1382 = vrot.slane %v1377, 4
    %v1384 = vadd.f32 %v1381, %v1382
    %vm1385 = vcmask 107520
    %v1386 = vsel %vm1385, %v1384, 0.0
    %1387 = vadd.xlane.f32.xlu0 %v1386
    %v1388 = vpop.xlane.xlu0 %1387
    %v1389 = vrcp.pop 42.0
    %v1390 = vmul.f32 %v1388, %v1389
    %1392 = vrot.lane.b32.xlu0 %v1384, 114
    %v1393 = vpop.permute.xlu0 %1392
    %vm1395 = vcmask 517120
    %v1396 = vsel %vm1395, %v1393, 0.0
    %1397 = vadd.xlane.f32.xlu0 %v1396
    %v1398 = vpop.xlane.xlu0 %1397
    %v1399 = vrcp.pop 192.0
    %v1400 = vmul.f32 %v1398, %v1399
    %v1401 = vrcp.pop 3.0
    %v1402 = vmul.f32 %v1384, %v1401
    %v1403 = vld [vmem:[%s6] sm:$0x3]
    %v1404 = vrcp.pop %v1358
    %v1405 = vrcp.pop %v1363
    %v1407 = vrot.slane %v1404, 4
    %v1409 = vmul.f32 %v1358, %v1407
    %1411 = vset.pattern.permute.xlu0 0
    %1412 = vperm.xlu0 %1411, %v1403
    %v1413 = vpop.permute.xlu0 %1412
    %v1415 = vmul.f32 %v1409, %v1413
    %v1416 = vadd.f32 %v1415, 8.0
    %v1417 = vrot.slane %v1404, 2
    %v1419 = vmul.f32 %v1358, %v1417
    %v1420 = vrot.slane %v1413, 6
    %v1422 = vmul.f32 %v1419, %v1420
    %v1423 = vadd.f32 %v1422, 8.0
    %v1425 = vrot.slane %v1405, 4
    %v1427 = vmul.f32 %v1358, %v1425
    %v1428 = vrot.slane %v1413, 2
    %v1430 = vmul.f32 %v1427, %v1428
    %v1431 = vadd.f32 %v1430, 8.0
    %v1432 = vrot.slane %v1405, 2
    %v1434 = vmul.f32 %v1363, %v1432
    %v1435 = vmul.f32 %v1434, %v1413
    %v1436 = vadd.f32 %v1435, 8.0
    %v1438 = vrot.slane %v1431, 6
    %v1440 = vsub.f32 %v1416, %v1438
    %v1441 = vand.u32 2147483647, %v1440
    %v1442 = vsel %vm1385, %v1441, 0.0
    %1443 = vadd.xlane.f32.xlu0 %v1442
    %v1444 = vpop.xlane.xlu0 %1443
    %v1446 = vrot.slane %v1436, 6
    %v1448 = vsub.f32 %v1423, %v1446
    %v1449 = vand.u32 2147483647, %v1448
    %vm1450 = vcmask 109570
    %v1451 = vsel %vm1450, %v1449, 0.0
    %1452 = vadd.xlane.f32.xlu0 %v1451
    %v1453 = vpop.xlane.xlu0 %1452
    %v1455 = vrot.slane %v1453, 2
    %v1457 = vadd.f32 %v1444, %v1455
    %v1458 = vrcp.pop 28.0
    %v1459 = vmul.f32 %v1457, %v1458
    %v1460 = vadd.f32 %v1400, %v1390
    %v1461 = vmul.f32 %v1402, 0.5
    %v1462 = vadd.f32 %v1460, %v1461
    %v1463 = vmul.f32 %v1459, 0.01
    %1465 = vrot.lane.b32.xlu0 %v1463, 78
    %v1466 = vpop.permute.xlu0 %1465
    %v1468 = vadd.f32 %v1462, %v1466
    %1470 = vrot.lane.b32.xlu0 %v1468, 50
    %v1471 = vpop.permute.xlu0 %1470
    %vm1473 = vcmask 1024
    %1474 = vst.msk [vmem:[%s7] sm:$0x3] %vm1473, %v1471
    // Predicated region
    $region38: #{tpu_custom_call.1} parent=1 // pred_check
      _
    $region39: #{tpu_custom_call.1} parent=1 // pred_check_branch
      %1476 = sbr.rel (0) target = $region41
    $region40: #{tpu_custom_call.1} parent=1 // pred_region
      _
    $region41: #{tpu_custom_call.1} parent=1 // pred_fallthru
      _
    // Predicated region
    $region42: #{tpu_custom_call.1} parent=1 // pred_check
      _
    $region43: #{tpu_custom_call.1} parent=1 // pred_check_branch
      %1478 = sbr.rel (0) target = $region45
    $region44: #{tpu_custom_call.1} parent=1 // pred_region
      _
    $region45: #{tpu_custom_call.1} parent=1 // pred_fallthru
      _
    // Predicated region
    $region46: #{tpu_custom_call.1} parent=1 // pred_check
      _
    $region47: #{tpu_custom_call.1} parent=1 // pred_check_branch
      %1480 = sbr.rel (0) target = $region49
    $region48: #{tpu_custom_call.1} parent=1 // pred_region
      _
    $region49: #{tpu_custom_call.1} parent=1 // pred_fallthru
      _
    // Predicated region
    $region50: #{tpu_custom_call.1} parent=1 // pred_check
      _
    $region51: #{tpu_custom_call.1} parent=1 // pred_check_branch
      %1482 = sbr.rel (0) target = $region53
    $region52: #{tpu_custom_call.1} parent=1 // pred_region
      %s1484 = ssub.s32 256, 256
      %1485 = vsyncadd [#allocation5], %s1484
      %s1486 = sshll.u32 [#allocation8], 4
      %s1487 = int_to_ptr.vmem [resolvable:$true] %s1486
      %1492 = dma.vmem_to_hbm [thread:$0]  %s1487, 256, %s10, [#allocation5], 128, 128, 8
    $region53: #{tpu_custom_call.1} parent=1 // pred_fallthru
      _
    // Predicated region
    $region54: #{tpu_custom_call.1} parent=1 // pred_check
      _
    $region55: #{tpu_custom_call.1} parent=1 // pred_check_branch
      %1494 = sbr.rel (0) target = $region57
    $region56: #{tpu_custom_call.1} parent=1 // pred_region
      _
    $region57: #{tpu_custom_call.1} parent=1 // pred_fallthru
      _
    // Predicated region
    $region58: #{tpu_custom_call.1} parent=1 // pred_check
      _
    $region59: #{tpu_custom_call.1} parent=1 // pred_check_branch
      %1496 = sbr.rel (0) target = $region61
    $region60: #{tpu_custom_call.1} parent=1 // pred_region
      _
    $region61: #{tpu_custom_call.1} parent=1 // pred_fallthru
      _
    // Predicated region
    $region62: #{tpu_custom_call.1} parent=1 // pred_check
      _
    $region63: #{tpu_custom_call.1} parent=1 // pred_check_branch
      %1498 = sbr.rel (0) target = $region65
    $region64: #{tpu_custom_call.1} parent=1 // pred_region
      _
    $region65: #{tpu_custom_call.1} parent=1 // pred_fallthru
      _
    // Predicated region
    $region66: #{tpu_custom_call.1} parent=1 // pred_check
      _
    $region67: #{tpu_custom_call.1} parent=1 // pred_check_branch
      %1500 = sbr.rel (0) target = $region69
    $region68: #{tpu_custom_call.1} parent=1 // pred_region
      %1501 = dma.done [#allocation5], 256
    $region69: #{tpu_custom_call.1} parent=1 // pred_fallthru
      _
    %1502 = vsyncpa [#allocation4], 1
    %1503 = vsyncpa [#allocation7], 1
    %1504 = vsyncpa [#allocation5], 1

</llo_original>
